<compile_context>
chip_gen: v5e
topology: v5e:2x2
jax: 0.10.0
libtpu: 0.0.40
codegen_flags: <defaults>
</compile_context>

<pallas_src>
import functools
import math

import jax
import jax.numpy as jnp
from jax.experimental import pallas as pl
from jax.experimental.pallas import tpu as pltpu


def _to_euclidean_kernel(x_ref, o_ref, *, d: int):
    """x_ref / o_ref: [TB, W] tiles; lanes [g*d, (g+1)*d) hold one sample [r, a1..a_{d-1}]."""
    x = x_ref[...].astype(jnp.float32)            # upcast once (v5e has no bf16 VPU/EUP)
    minor = x.ndim - 1
    w = x.shape[minor]
    lane = jax.lax.broadcasted_iota(jnp.int32, x.shape, dimension=minor) % d

    # Seed the segmented product: radius r at group offset 0, sin(angle) elsewhere.
    p = jnp.where(lane == 0, x, jnp.sin(x))

    # Segmented inclusive product-scan within each group of d lanes
    # (Hillis-Steele: ceil(log2(d)) masked XLU rolls; mask stops cross-group mixing).
    shift = 1
    while shift < d:
        rolled = pltpu.roll(p, shift, axis=minor)        # rolled[l] = p[l - shift]
        p = jnp.where(lane >= shift, p * rolled, p)
        shift *= 2
    # Now p[.., g*d + j] = r * sin(a1) * ... * sin(aj)   for sample g.

    # Trailing factor: cos of the *next* angle; 1 on the last coordinate of each group.
    cos_next = pltpu.roll(jnp.cos(x), w - 1, axis=minor)  # cos_next[l] = cos(x[l + 1])
    t = jnp.where(lane == d - 1, jnp.float32(1.0), cos_next)

    o_ref[...] = (p * t).astype(o_ref.dtype)


# ~2 MiB of input per grid step: DMA-bound (grid overhead ~0.35us becomes <10%),
# while double-buffered in+out plus compute temporaries stay well under the
# 40-48 MiB budget that is safe on v7x (64 MiB physical VMEM).
_TARGET_BLOCK_BYTES = 2 * 1024 * 1024
_VMEM_LIMIT_BYTES = 48 * 1024 * 1024


def to_euclidean(x: jax.Array, input_dim: int, *, block_rows: int | None = None) -> jax.Array:
    """x: [B, input_dim] in N-sphere coordinates -> [B, input_dim] Euclidean."""
    if x.ndim != 2 or x.shape[1] != input_dim:
        raise ValueError(f"Expected {input_dim} dimensions, but found {x.shape}")
    B, D = x.shape
    if D < 2:
        raise ValueError("input_dim must be >= 2")
    orig_dtype = x.dtype

    # Lane-dense packing: W = lcm(D, 128) lanes per row, G samples per row.
    W = (D * 128) // math.gcd(D, 128)
    G = W // D
    Bp = pl.cdiv(B, G) * G
    if Bp != B:
        # Tiny alignment pad (< G rows) so the free reshape below is valid.
        # Padded rows have r = 0 -> zero outputs, sliced away at the end.
        x = jnp.pad(x, ((0, Bp - B), (0, 0)))
    R = Bp // G
    xr = x.reshape(R, W)                 # free reshape (contiguous), no transpose

    bytes_per_row = W * x.dtype.itemsize
    if block_rows is None:
        block_rows = max(8, _TARGET_BLOCK_BYTES // bytes_per_row)
    block_rows = min(block_rows, R)
    if block_rows < R:
        block_rows = max(8, (block_rows // 8) * 8)   # sublane-aligned partial blocks

    grid = (pl.cdiv(R, block_rows),)

    out_r = pl.pallas_call(
        functools.partial(_to_euclidean_kernel, d=D),
        out_shape=jax.ShapeDtypeStruct((R, W), orig_dtype),
        grid_spec=pltpu.PrefetchScalarGridSpec(
            num_scalar_prefetch=0,
            grid=grid,
            in_specs=[pl.BlockSpec((block_rows, W), lambda i: (i, 0))],
            out_specs=pl.BlockSpec((block_rows, W), lambda i: (i, 0)),
        ),
        compiler_params=pltpu.CompilerParams(
            dimension_semantics=("parallel",),
            vmem_limit_bytes=_VMEM_LIMIT_BYTES,
        ),
    )(xr)

    out = out_r.reshape(Bp, D)           # free reshape back
    if Bp != B:
        out = out[:B]
    return out


def _reference(x: jax.Array) -> jax.Array:
    """Pure-JAX transliteration of the PyTorch forward (for verification)."""
    D = x.shape[1]
    cur = x[:, 0]
    cols = [cur * jnp.cos(x[:, 1])]
    for i in range(2, D):
        cur = cur * jnp.sin(x[:, i - 1])
        cols.append(cur * jnp.cos(x[:, i]))
    cols.append(cur * jnp.sin(x[:, D - 1]))
    return jnp.stack(cols, axis=1)


if __name__ == "__main__":
    key = jax.random.PRNGKey(0)

    def make_input(k, batch, dim):
        k_r, k_a = jax.random.split(k)
        r = jax.random.uniform(k_r, (batch, 1), jnp.float32, 0.5, 1.5)
        ang = jax.random.uniform(k_a, (batch, dim - 1), jnp.float32, 0.0, jnp.pi)
        return jnp.concatenate([r, ang], axis=1)

    # (batch, dim, block_rows): main case, ragged-grid case (masked last block),
    # batch not a multiple of the lane group (pad path), and the D == 2 edge case.
    checks = [
        (1024, 8, None),
        (704, 8, 16),
        (100, 8, None),
        (256, 2, None),
    ]
    for idx, (b, d, br) in enumerate(checks):
        key, sub = jax.random.split(key)
        x = make_input(sub, b, d)
        out = jax.block_until_ready(to_euclidean(x, d, block_rows=br))
        ref = _reference(x)
        assert out.shape == (b, d), f"case {idx}: bad shape {out.shape}"
        assert jnp.allclose(out, ref, atol=1e-5, rtol=1e-4), f"case {idx}: mismatch"
    print("KERNEL_OK")
</pallas_src>

<mosaic_0001>
module attributes {stable_mosaic.version = 11 : i64} {
  func.func @_to_euclidean_kernel(%arg0: i32, %arg1: memref<64x128xf32, #tpu.memory_space<vmem>>, %arg2: memref<64x128xf32, #tpu.memory_space<vmem>>) attributes {dimension_semantics = [#tpu.dimension_semantics<parallel>], iteration_bounds = array<i64: 1>, scalar_prefetch = 0 : i64, scratch_operands = 0 : i64, tpu.core_type = #tpu.core_type<tc>, window_params = [{transform_indices = @transform_0, window_bounds = array<i64: 64, 128>}, {transform_indices = @transform_1, window_bounds = array<i64: 64, 128>}]} {
    %c0 = arith.constant 0 : index
    %c0_0 = arith.constant 0 : index
    %0 = vector.load %arg1[%c0, %c0_0] : memref<64x128xf32, #tpu.memory_space<vmem>>, vector<64x128xf32>
    %1 = tpu.iota {dimensions = array<i32: 1>} : vector<64x128xi32>
    %c8_i32 = arith.constant 8 : i32
    %c0_i32 = arith.constant 0 : i32
    %2 = arith.cmpi eq, %c8_i32, %c0_i32 : i32
    %c1_i32 = arith.constant 1 : i32
    %3 = arith.select %2, %c1_i32, %c8_i32 : i32
    %4 = vector.broadcast %3 : i32 to vector<64x128xi32>
    %5 = arith.remsi %1, %4 : vector<64x128xi32>
    %c0_i32_1 = arith.constant 0 : i32
    %6 = vector.broadcast %c0_i32_1 : i32 to vector<64x128xi32>
    %7 = arith.cmpi ne, %5, %6 : vector<64x128xi32>
    %c0_i32_2 = arith.constant 0 : i32
    %8 = vector.broadcast %c0_i32_2 : i32 to vector<64x128xi32>
    %9 = arith.cmpi slt, %5, %8 : vector<64x128xi32>
    %c0_i32_3 = arith.constant 0 : i32
    %10 = arith.cmpi slt, %3, %c0_i32_3 : i32
    %11 = vector.broadcast %10 : i1 to vector<64x128xi1>
    %12 = vector.broadcast %11 : vector<64x128xi1> to vector<64x128xi1>
    %13 = arith.xori %9, %12 : vector<64x128xi1>
    %14 = arith.andi %13, %7 : vector<64x128xi1>
    %15 = vector.broadcast %3 : i32 to vector<64x128xi32>
    %16 = arith.addi %5, %15 : vector<64x128xi32>
    %17 = arith.select %14, %16, %5 : vector<64x128xi1>, vector<64x128xi32>
    %c0_i32_4 = arith.constant 0 : i32
    %18 = vector.broadcast %c0_i32_4 : i32 to vector<64x128xi32>
    %19 = arith.cmpi eq, %17, %18 : vector<64x128xi32>
    %20 = math.sin %0 : vector<64x128xf32>
    %21 = arith.select %19, %0, %20 : vector<64x128xi1>, vector<64x128xf32>
    %c1_i32_5 = arith.constant 1 : i32
    %22 = tpu.dynamic_rotate %21 by %c1_i32_5 dim 1 : vector<64x128xf32>, i32 -> vector<64x128xf32>
    %c1_i32_6 = arith.constant 1 : i32
    %23 = vector.broadcast %c1_i32_6 : i32 to vector<64x128xi32>
    %24 = arith.cmpi sge, %17, %23 : vector<64x128xi32>
    %25 = arith.mulf %21, %22 : vector<64x128xf32>
    %26 = arith.select %24, %25, %21 : vector<64x128xi1>, vector<64x128xf32>
    %c2_i32 = arith.constant 2 : i32
    %27 = tpu.dynamic_rotate %26 by %c2_i32 dim 1 : vector<64x128xf32>, i32 -> vector<64x128xf32>
    %c2_i32_7 = arith.constant 2 : i32
    %28 = vector.broadcast %c2_i32_7 : i32 to vector<64x128xi32>
    %29 = arith.cmpi sge, %17, %28 : vector<64x128xi32>
    %30 = arith.mulf %26, %27 : vector<64x128xf32>
    %31 = arith.select %29, %30, %26 : vector<64x128xi1>, vector<64x128xf32>
    %c4_i32 = arith.constant 4 : i32
    %32 = tpu.dynamic_rotate %31 by %c4_i32 dim 1 : vector<64x128xf32>, i32 -> vector<64x128xf32>
    %c4_i32_8 = arith.constant 4 : i32
    %33 = vector.broadcast %c4_i32_8 : i32 to vector<64x128xi32>
    %34 = arith.cmpi sge, %17, %33 : vector<64x128xi32>
    %35 = arith.mulf %31, %32 : vector<64x128xf32>
    %36 = arith.select %34, %35, %31 : vector<64x128xi1>, vector<64x128xf32>
    %37 = math.cos %0 : vector<64x128xf32>
    %c127_i32 = arith.constant 127 : i32
    %38 = tpu.dynamic_rotate %37 by %c127_i32 dim 1 : vector<64x128xf32>, i32 -> vector<64x128xf32>
    %c7_i32 = arith.constant 7 : i32
    %39 = vector.broadcast %c7_i32 : i32 to vector<64x128xi32>
    %40 = arith.cmpi eq, %17, %39 : vector<64x128xi32>
    %cst = arith.constant 1.000000e+00 : f32
    %41 = vector.broadcast %cst : f32 to vector<64x128xf32>
    %42 = arith.select %40, %41, %38 : vector<64x128xi1>, vector<64x128xf32>
    %43 = arith.mulf %36, %42 : vector<64x128xf32>
    %c0_9 = arith.constant 0 : index
    %c0_10 = arith.constant 0 : index
    %44 = vector.load %arg2[%c0_9, %c0_10] : memref<64x128xf32, #tpu.memory_space<vmem>>, vector<64x128xf32>
    tpu.vector_store %arg2[%c0_9, %c0_10], %43 {strides = array<i32>} : memref<64x128xf32, #tpu.memory_space<vmem>>, vector<64x128xf32>,
    return
  }
  func.func @transform_0(%arg0: i32) -> (i32, i32) {
    %c0_i32 = arith.constant 0 : i32
    %c0_i32_0 = arith.constant 0 : i32
    return %arg0, %c0_i32 : i32, i32
  }
  func.func @transform_1(%arg0: i32) -> (i32, i32) {
    %c0_i32 = arith.constant 0 : i32
    %c0_i32_0 = arith.constant 0 : i32
    return %arg0, %c0_i32 : i32, i32
  }
}

</mosaic_0001>

<llo_original>
// kernel: tpu_custom_call.1
$region0: #{tpu_custom_call.1}
  #allocation0 [shape = 'u32[]', space=smem, size = 0x4, offset = 0x4, fixed_abs, tag = 'smem constant byte address 0x4 - core index']
  #allocation1 [shape = 'u32[72,128]{1,0:T(1,128)}', space=vmem, size = 0x9000, scoped, tag = 'internal scratch']
  %s0 = inlined_call_operand.hbm [shape: f32[64,128], index: 0, kind: input, shape index: {}]
  %s1 = inlined_call_operand.hbm [shape: f32[64,128], index: 1, kind: output, shape index: {}]
  %s2 = sld [smem:[#allocation0]]
  $region18: #{tpu_custom_call.1} parent=0
    _
  %s4 = ssub.s32 1, %s2
  %s5 = scalar_select 0, %s4, %s2
  $region1: #{tpu_custom_call.1} parent=0
    #allocation2 [shape = 'u8[32768]{0}', space=vmem, size = 0x8000, scoped, tag = 'input window, operand 0, single buffered']
    #allocation3 [shape = 's32[1]{0}', space=sflag, size = 0x4, scoped, tag = 'scoped memory for tpu_custom_call.1']
    #allocation4 [shape = 's32[1]{0}', space=sflag, size = 0x4, scoped, tag = 'scoped memory for tpu_custom_call.1']
    #allocation5 [shape = 'u8[32768]{0}', space=vmem, size = 0x8000, scoped, tag = 'output window, operand 0, single buffered']
    %6 = vsyncpa [#allocation3], 0
    %7 = vsyncpa [#allocation4], 0
    // Predicated region
    $region2: #{tpu_custom_call.1} parent=1 // pred_check
      _
    $region3: #{tpu_custom_call.1} parent=1 // pred_check_branch
      %9 = sbr.rel (0) target = $region5
    $region4: #{tpu_custom_call.1} parent=1 // pred_region
      %11 = vsyncadd [#allocation3], 0
      %s12 = sshll.u32 %s0, 4
      %s13 = int_to_ptr.hbm [resolvable:$true] %s12
      %s14 = sshll.u32 [#allocation2], 4
      %s15 = int_to_ptr.vmem [resolvable:$true] %s14
      %20 = dma.hbm_to_vmem [thread:$0]  %s13, 1024, %s15, [#allocation3], 128, 128, 8
    $region5: #{tpu_custom_call.1} parent=1 // pred_fallthru
      _
    // Predicated region
    $region6: #{tpu_custom_call.1} parent=1 // pred_check
      _
    $region7: #{tpu_custom_call.1} parent=1 // pred_check_branch
      %22 = sbr.rel (0) target = $region9
    $region8: #{tpu_custom_call.1} parent=1 // pred_region
      %24 = dma.done [#allocation3], 1024
    $region9: #{tpu_custom_call.1} parent=1 // pred_fallthru
      _
    %v25 = vld [vmem:[#allocation2] sm:$0xff]
    %v26 = vld [vmem:[#allocation2 + $0x8] sm:$0xff]
    %v27 = vld [vmem:[#allocation2 + $0x10] sm:$0xff]
    %v28 = vld [vmem:[#allocation2 + $0x18] sm:$0xff]
    %v29 = vld [vmem:[#allocation2 + $0x20] sm:$0xff]
    %v30 = vld [vmem:[#allocation2 + $0x28] sm:$0xff]
    %v31 = vld [vmem:[#allocation2 + $0x30] sm:$0xff]
    %v32 = vld [vmem:[#allocation2 + $0x38] sm:$0xff]
    %v33 = vlaneseq
    %v34 = vand.u32 %v33, 127
    %vm35 = vcmp.lt.s32.totalorder %v34, 0
    %v36 = vsub.s32 0, %v34
    %v37 = vsel %vm35, %v36, %v34
    %v38 = vshrl.u32 %v37, 3
    %v39 = vand.u32 %v37, 7
    %v40 = vsub.s32 0, %v39
    %v41 = vsel %vm35, %v40, %v39
    %vm42 = vcmp.ne.s32.totalorder %v41, 0
    %vm43 = vcmp.lt.s32.totalorder %v41, 0
    %vm44 = vmand %vm43, %vm42
    %v45 = vadd.s32 %v41, 8
    %v46 = vsel %vm44, %v45, %v41
    %vm47 = vcmp.eq.s32.totalorder %v46, 0
    %v48 = vand.u32 2147483647, %v25
    %vm49 = vcmp.le.f32.partialorder %v48, 0.7853982
    %vm50 = vcmp.lt.s32.totalorder %v25, 0
    %v51 = vand.u32 %v25, 2139095040
    %v52 = vshrl.u32 %v51, 23
    %v53 = vsub.s32 %v52, 127
    %v54 = vand.u32 2147483647, %v25
    %v55 = vand.u32 %v54, 8388607
    %v56 = vor.u32 %v55, 8388608
    %v57 = vsub.s32 0, %v56
    %v58 = vadd.s32 %v53, 1
    %vm59 = vcmp.gt.s32.totalorder %v58, 0
    %v60 = vsel %vm59, %v58, 0
    %v61 = vshrl.u32 %v60, 5
    %v62 = vand.u32 %v60, 31
    %v63 = vsub.s32 32, %v62
    %v64 = vshrl.u32 683565275, %v63
    %v65 = vshll.u32 683565275, %v62
    %v66 = vshrl.u32 2475754826, %v63
    %v67 = vor.u32 %v65, %v66
    %v68 = vshll.u32 2475754826, %v62
    %v69 = vshrl.u32 2131351028, %v63
    %v70 = vor.u32 %v68, %v69
    %v71 = vshll.u32 2131351028, %v62
    %v72 = vshrl.u32 2102212464, %v63
    %v73 = vor.u32 %v71, %v72
    %v74 = vshll.u32 2102212464, %v62
    %v75 = vshrl.u32 920167782, %v63
    %v76 = vor.u32 %v74, %v75
    %v77 = vshll.u32 920167782, %v62
    %v78 = vshrl.u32 1326507024, %v63
    %v79 = vor.u32 %v77, %v78
    %vm80 = vcmp.lt.s32.totalorder %v61, 1
    %vm81 = vcmp.lt.s32.totalorder %v61, 2
    %vm82 = vcmp.lt.s32.totalorder %v61, 3
    %vm83 = vcmp.lt.s32.totalorder %v61, 4
    %v84 = vsel %vm80, %v64, %v67
    %v85 = vsel %vm83, %v73, 2102212464
    %v86 = vsel %vm82, %v70, %v85
    %v87 = vsel %vm81, %v84, %v86
    %v88 = vsel %vm80, %v67, %v70
    %v89 = vsel %vm83, %v76, 920167782
    %v90 = vsel %vm82, %v73, %v89
    %v91 = vsel %vm81, %v88, %v90
    %v92 = vsel %vm80, %v70, %v73
    %v93 = vsel %vm83, %v79, 1326507024
    %v94 = vsel %vm82, %v76, %v93
    %v95 = vsel %vm81, %v92, %v94
    %v96 = vshll.u32 %v56, 8
    %v97 = vand.u32 %v96, 65535
    %v98 = vshrl.u32 %v96, 16
    %v99 = vand.u32 %v95, 65535
    %v100 = vshrl.u32 %v95, 16
    %v101 = vmul.u32 %v97, %v99
    %v102 = vmul.u32 %v97, %v100
    %v103 = vmul.u32 %v98, %v99
    %v104 = vmul.u32 %v98, %v100
    %v105 = vshll.u32 %v102, 16
    %v106 = vshrl.u32 %v102, 16
    %v107 = vshll.u32 %v103, 16
    %v108 = vshrl.u32 %v103, 16
    %vm109 = vc.u32 %v101, %v105
    %v110 = vsel %vm109, 1, 0
    %v111 = vadd.s32 %v101, %v105
    %v112 = vadd.s32 %v104, %v110
    %vm113 = vc.u32 %v111, %v107
    %v114 = vsel %vm113, 1, 0
    %v115 = vadd.s32 %v111, %v107
    %v116 = vadd.s32 %v112, %v114
    %v117 = vadd.s32 %v116, %v106
    %v118 = vadd.s32 %v117, %v108
    %v119 = vand.u32 %v96, 65535
    %v120 = vshrl.u32 %v96, 16
    %v121 = vand.u32 %v91, 65535
    %v122 = vshrl.u32 %v91, 16
    %v123 = vmul.u32 %v119, %v121
    %v124 = vmul.u32 %v119, %v122
    %v125 = vmul.u32 %v120, %v121
    %v126 = vmul.u32 %v120, %v122
    %v127 = vshll.u32 %v124, 16
    %v128 = vshrl.u32 %v124, 16
    %v129 = vshll.u32 %v125, 16
    %v130 = vshrl.u32 %v125, 16
    %vm131 = vc.u32 %v123, %v127
    %v132 = vsel %vm131, 1, 0
    %v133 = vadd.s32 %v123, %v127
    %v134 = vadd.s32 %v126, %v132
    %vm135 = vc.u32 %v133, %v129
    %v136 = vsel %vm135, 1, 0
    %v137 = vadd.s32 %v133, %v129
    %v138 = vadd.s32 %v134, %v136
    %v139 = vadd.s32 %v138, %v128
    %v140 = vadd.s32 %v139, %v130
    %v141 = vmul.u32 %v96, %v87
    %v142 = vadd.s32 %v118, %v137
    %vm143 = vc.u32 %v118, %v137
    %v144 = vadd.s32 %v140, 1
    %v145 = vsel %vm143, %v144, %v140
    %v146 = vadd.s32 %v141, %v145
    %v147 = vadd.s32 %v146, 536870912
    %v148 = vshrl.u32 %v147, 30
    %v149 = vshll.u32 %v148, 30
    %v150 = vsub.s32 %v146, %v149
    %vm151 = vcmp.lt.s32.totalorder %v150, 0
    %v152 = vsub.s32 0, %v150
    %v153 = vsel %vm151, %v152, %v150
    %v154 = vclz %v153
    %v155 = vsub.s32 %v154, 2
    %vm156 = vcmp.gt.s32.totalorder 0, %v155
    %v157 = vsel %vm156, 0, %v155
    %v158 = vsub.s32 32, %v157
    %v159 = vshll.u32 %v150, %v157
    %v160 = vshrl.u32 %v142, %v158
    %v161 = vor.u32 %v159, %v160
    %v162 = vsub.s32 4294967266, %v157
    %v163 = vadd.s32 %v162, 127
    %v164 = vshll.u32 %v163, 23
    %v165 = vor.u32 4788187, %v164
    %v166 = vand.u32 2147483647, %v165
    %v168 = vcvt.s32.f32 %v161
    %v169 = vmul.f32 %v168, %v166
    %v170 = vxor.u32 %v169, 2147483648
    %v171 = vsel %vm50, %v170, %v169
    %v172 = vsub.s32 4, %v148
    %v173 = vsel %vm50, %v172, %v148
    %v174 = vsel %vm49, %v25, %v171
    %v175 = vsel %vm49, 0, %v173
    %v176 = vmul.f32 %v174, %v174
    %v177 = vmul.f32 %v176, -0.001358992
    %v178 = vadd.f32 %v177, 0.041655596
    %v179 = vmul.f32 %v176, %v178
    %v180 = vadd.f32 %v179, -0.4999988
    %v181 = vmul.f32 %v176, %v180
    %v182 = vadd.f32 1.0, %v181
    %v183 = vmul.f32 %v174, %v174
    %v184 = vmul.f32 %v183, -0.00019511016
    %v185 = vadd.f32 %v184, 0.008332121
    %v186 = vmul.f32 %v183, %v185
    %v187 = vadd.f32 %v186, -0.16666654
    %v188 = vmul.f32 %v183, %v187
    %v189 = vadd.f32 %v188, 1.0
    %v190 = vmul.f32 %v189, %v174
    %vm191 = vweird.f32 %v25
    %v192 = vadd.s32 %v175, 3
    %v193 = vand.u32 %v192, 3
    %vm194 = vcmp.lt.s32.totalorder %v193, 2
    %vm195 = vcmp.eq.s32.totalorder %v193, 0
    %v196 = vxor.u32 %v190, 2147483648
    %v197 = vsel %vm195, %v182, %v196
    %vm198 = vcmp.eq.s32.totalorder %v193, 2
    %v199 = vxor.u32 %v182, 2147483648
    %v200 = vsel %vm198, %v199, %v190
    %v201 = vsel %vm194, %v197, %v200
    %v202 = vsel %vm191, nan, %v201
    %v203 = vand.u32 2147483647, %v26
    %vm204 = vcmp.le.f32.partialorder %v203, 0.7853982
    %vm205 = vcmp.lt.s32.totalorder %v26, 0
    %v206 = vand.u32 %v26, 2139095040
    %v207 = vshrl.u32 %v206, 23
    %v208 = vsub.s32 %v207, 127
    %v209 = vand.u32 2147483647, %v26
    %v210 = vand.u32 %v209, 8388607
    %v211 = vor.u32 %v210, 8388608
    %v212 = vsub.s32 0, %v211
    %v213 = vadd.s32 %v208, 1
    %vm214 = vcmp.gt.s32.totalorder %v213, 0
    %v215 = vsel %vm214, %v213, 0
    %v216 = vshrl.u32 %v215, 5
    %v217 = vand.u32 %v215, 31
    %v218 = vsub.s32 32, %v217
    %v219 = vshrl.u32 683565275, %v218
    %v220 = vshll.u32 683565275, %v217
    %v221 = vshrl.u32 2475754826, %v218
    %v222 = vor.u32 %v220, %v221
    %v223 = vshll.u32 2475754826, %v217
    %v224 = vshrl.u32 2131351028, %v218
    %v225 = vor.u32 %v223, %v224
    %v226 = vshll.u32 2131351028, %v217
    %v227 = vshrl.u32 2102212464, %v218
    %v228 = vor.u32 %v226, %v227
    %v229 = vshll.u32 2102212464, %v217
    %v230 = vshrl.u32 920167782, %v218
    %v231 = vor.u32 %v229, %v230
    %v232 = vshll.u32 920167782, %v217
    %v233 = vshrl.u32 1326507024, %v218
    %v234 = vor.u32 %v232, %v233
    %vm235 = vcmp.lt.s32.totalorder %v216, 1
    %vm236 = vcmp.lt.s32.totalorder %v216, 2
    %vm237 = vcmp.lt.s32.totalorder %v216, 3
    %vm238 = vcmp.lt.s32.totalorder %v216, 4
    %v239 = vsel %vm235, %v219, %v222
    %v240 = vsel %vm238, %v228, 2102212464
    %v241 = vsel %vm237, %v225, %v240
    %v242 = vsel %vm236, %v239, %v241
    %v243 = vsel %vm235, %v222, %v225
    %v244 = vsel %vm238, %v231, 920167782
    %v245 = vsel %vm237, %v228, %v244
    %v246 = vsel %vm236, %v243, %v245
    %v247 = vsel %vm235, %v225, %v228
    %v248 = vsel %vm238, %v234, 1326507024
    %v249 = vsel %vm237, %v231, %v248
    %v250 = vsel %vm236, %v247, %v249
    %v251 = vshll.u32 %v211, 8
    %v252 = vand.u32 %v251, 65535
    %v253 = vshrl.u32 %v251, 16
    %v254 = vand.u32 %v250, 65535
    %v255 = vshrl.u32 %v250, 16
    %v256 = vmul.u32 %v252, %v254
    %v257 = vmul.u32 %v252, %v255
    %v258 = vmul.u32 %v253, %v254
    %v259 = vmul.u32 %v253, %v255
    %v260 = vshll.u32 %v257, 16
    %v261 = vshrl.u32 %v257, 16
    %v262 = vshll.u32 %v258, 16
    %v263 = vshrl.u32 %v258, 16
    %vm264 = vc.u32 %v256, %v260
    %v265 = vsel %vm264, 1, 0
    %v266 = vadd.s32 %v256, %v260
    %v267 = vadd.s32 %v259, %v265
    %vm268 = vc.u32 %v266, %v262
    %v269 = vsel %vm268, 1, 0
    %v270 = vadd.s32 %v266, %v262
    %v271 = vadd.s32 %v267, %v269
    %v272 = vadd.s32 %v271, %v261
    %v273 = vadd.s32 %v272, %v263
    %v274 = vand.u32 %v251, 65535
    %v275 = vshrl.u32 %v251, 16
    %v276 = vand.u32 %v246, 65535
    %v277 = vshrl.u32 %v246, 16
    %v278 = vmul.u32 %v274, %v276
    %v279 = vmul.u32 %v274, %v277
    %v280 = vmul.u32 %v275, %v276
    %v281 = vmul.u32 %v275, %v277
    %v282 = vshll.u32 %v279, 16
    %v283 = vshrl.u32 %v279, 16
    %v284 = vshll.u32 %v280, 16
    %v285 = vshrl.u32 %v280, 16
    %vm286 = vc.u32 %v278, %v282
    %v287 = vsel %vm286, 1, 0
    %v288 = vadd.s32 %v278, %v282
    %v289 = vadd.s32 %v281, %v287
    %vm290 = vc.u32 %v288, %v284
    %v291 = vsel %vm290, 1, 0
    %v292 = vadd.s32 %v288, %v284
    %v293 = vadd.s32 %v289, %v291
    %v294 = vadd.s32 %v293, %v283
    %v295 = vadd.s32 %v294, %v285
    %v296 = vmul.u32 %v251, %v242
    %v297 = vadd.s32 %v273, %v292
    %vm298 = vc.u32 %v273, %v292
    %v299 = vadd.s32 %v295, 1
    %v300 = vsel %vm298, %v299, %v295
    %v301 = vadd.s32 %v296, %v300
    %v302 = vadd.s32 %v301, 536870912
    %v303 = vshrl.u32 %v302, 30
    %v304 = vshll.u32 %v303, 30
    %v305 = vsub.s32 %v301, %v304
    %vm306 = vcmp.lt.s32.totalorder %v305, 0
    %v307 = vsub.s32 0, %v305
    %v308 = vsel %vm306, %v307, %v305
    %v309 = vclz %v308
    %v310 = vsub.s32 %v309, 2
    %vm311 = vcmp.gt.s32.totalorder 0, %v310
    %v312 = vsel %vm311, 0, %v310
    %v313 = vsub.s32 32, %v312
    %v314 = vshll.u32 %v305, %v312
    %v315 = vshrl.u32 %v297, %v313
    %v316 = vor.u32 %v314, %v315
    %v317 = vsub.s32 4294967266, %v312
    %v318 = vadd.s32 %v317, 127
    %v319 = vshll.u32 %v318, 23
    %v320 = vor.u32 4788187, %v319
    %v321 = vand.u32 2147483647, %v320
    %v323 = vcvt.s32.f32 %v316
    %v324 = vmul.f32 %v323, %v321
    %v325 = vxor.u32 %v324, 2147483648
    %v326 = vsel %vm205, %v325, %v324
    %v327 = vsub.s32 4, %v303
    %v328 = vsel %vm205, %v327, %v303
    %v329 = vsel %vm204, %v26, %v326
    %v330 = vsel %vm204, 0, %v328
    %v331 = vmul.f32 %v329, %v329
    %v332 = vmul.f32 %v331, -0.001358992
    %v333 = vadd.f32 %v332, 0.041655596
    %v334 = vmul.f32 %v331, %v333
    %v335 = vadd.f32 %v334, -0.4999988
    %v336 = vmul.f32 %v331, %v335
    %v337 = vadd.f32 1.0, %v336
    %v338 = vmul.f32 %v329, %v329
    %v339 = vmul.f32 %v338, -0.00019511016
    %v340 = vadd.f32 %v339, 0.008332121
    %v341 = vmul.f32 %v338, %v340
    %v342 = vadd.f32 %v341, -0.16666654
    %v343 = vmul.f32 %v338, %v342
    %v344 = vadd.f32 %v343, 1.0
    %v345 = vmul.f32 %v344, %v329
    %vm346 = vweird.f32 %v26
    %v347 = vadd.s32 %v330, 3
    %v348 = vand.u32 %v347, 3
    %vm349 = vcmp.lt.s32.totalorder %v348, 2
    %vm350 = vcmp.eq.s32.totalorder %v348, 0
    %v351 = vxor.u32 %v345, 2147483648
    %v352 = vsel %vm350, %v337, %v351
    %vm353 = vcmp.eq.s32.totalorder %v348, 2
    %v354 = vxor.u32 %v337, 2147483648
    %v355 = vsel %vm353, %v354, %v345
    %v356 = vsel %vm349, %v352, %v355
    %v357 = vsel %vm346, nan, %v356
    %v358 = vand.u32 2147483647, %v27
    %vm359 = vcmp.le.f32.partialorder %v358, 0.7853982
    %vm360 = vcmp.lt.s32.totalorder %v27, 0
    %v361 = vand.u32 %v27, 2139095040
    %v362 = vshrl.u32 %v361, 23
    %v363 = vsub.s32 %v362, 127
    %v364 = vand.u32 2147483647, %v27
    %v365 = vand.u32 %v364, 8388607
    %v366 = vor.u32 %v365, 8388608
    %v367 = vsub.s32 0, %v366
    %v368 = vadd.s32 %v363, 1
    %vm369 = vcmp.gt.s32.totalorder %v368, 0
    %v370 = vsel %vm369, %v368, 0
    %v371 = vshrl.u32 %v370, 5
    %v372 = vand.u32 %v370, 31
    %v373 = vsub.s32 32, %v372
    %v374 = vshrl.u32 683565275, %v373
    %v375 = vshll.u32 683565275, %v372
    %v376 = vshrl.u32 2475754826, %v373
    %v377 = vor.u32 %v375, %v376
    %v378 = vshll.u32 2475754826, %v372
    %v379 = vshrl.u32 2131351028, %v373
    %v380 = vor.u32 %v378, %v379
    %v381 = vshll.u32 2131351028, %v372
    %v382 = vshrl.u32 2102212464, %v373
    %v383 = vor.u32 %v381, %v382
    %v384 = vshll.u32 2102212464, %v372
    %v385 = vshrl.u32 920167782, %v373
    %v386 = vor.u32 %v384, %v385
    %v387 = vshll.u32 920167782, %v372
    %v388 = vshrl.u32 1326507024, %v373
    %v389 = vor.u32 %v387, %v388
    %vm390 = vcmp.lt.s32.totalorder %v371, 1
    %vm391 = vcmp.lt.s32.totalorder %v371, 2
    %vm392 = vcmp.lt.s32.totalorder %v371, 3
    %vm393 = vcmp.lt.s32.totalorder %v371, 4
    %v394 = vsel %vm390, %v374, %v377
    %v395 = vsel %vm393, %v383, 2102212464
    %v396 = vsel %vm392, %v380, %v395
    %v397 = vsel %vm391, %v394, %v396
    %v398 = vsel %vm390, %v377, %v380
    %v399 = vsel %vm393, %v386, 920167782
    %v400 = vsel %vm392, %v383, %v399
    %v401 = vsel %vm391, %v398, %v400
    %v402 = vsel %vm390, %v380, %v383
    %v403 = vsel %vm393, %v389, 1326507024
    %v404 = vsel %vm392, %v386, %v403
    %v405 = vsel %vm391, %v402, %v404
    %v406 = vshll.u32 %v366, 8
    %v407 = vand.u32 %v406, 65535
    %v408 = vshrl.u32 %v406, 16
    %v409 = vand.u32 %v405, 65535
    %v410 = vshrl.u32 %v405, 16
    %v411 = vmul.u32 %v407, %v409
    %v412 = vmul.u32 %v407, %v410
    %v413 = vmul.u32 %v408, %v409
    %v414 = vmul.u32 %v408, %v410
    %v415 = vshll.u32 %v412, 16
    %v416 = vshrl.u32 %v412, 16
    %v417 = vshll.u32 %v413, 16
    %v418 = vshrl.u32 %v413, 16
    %vm419 = vc.u32 %v411, %v415
    %v420 = vsel %vm419, 1, 0
    %v421 = vadd.s32 %v411, %v415
    %v422 = vadd.s32 %v414, %v420
    %vm423 = vc.u32 %v421, %v417
    %v424 = vsel %vm423, 1, 0
    %v425 = vadd.s32 %v421, %v417
    %v426 = vadd.s32 %v422, %v424
    %v427 = vadd.s32 %v426, %v416
    %v428 = vadd.s32 %v427, %v418
    %v429 = vand.u32 %v406, 65535
    %v430 = vshrl.u32 %v406, 16
    %v431 = vand.u32 %v401, 65535
    %v432 = vshrl.u32 %v401, 16
    %v433 = vmul.u32 %v429, %v431
    %v434 = vmul.u32 %v429, %v432
    %v435 = vmul.u32 %v430, %v431
    %v436 = vmul.u32 %v430, %v432
    %v437 = vshll.u32 %v434, 16
    %v438 = vshrl.u32 %v434, 16
    %v439 = vshll.u32 %v435, 16
    %v440 = vshrl.u32 %v435, 16
    %vm441 = vc.u32 %v433, %v437
    %v442 = vsel %vm441, 1, 0
    %v443 = vadd.s32 %v433, %v437
    %v444 = vadd.s32 %v436, %v442
    %vm445 = vc.u32 %v443, %v439
    %v446 = vsel %vm445, 1, 0
    %v447 = vadd.s32 %v443, %v439
    %v448 = vadd.s32 %v444, %v446
    %v449 = vadd.s32 %v448, %v438
    %v450 = vadd.s32 %v449, %v440
    %v451 = vmul.u32 %v406, %v397
    %v452 = vadd.s32 %v428, %v447
    %vm453 = vc.u32 %v428, %v447
    %v454 = vadd.s32 %v450, 1
    %v455 = vsel %vm453, %v454, %v450
    %v456 = vadd.s32 %v451, %v455
    %v457 = vadd.s32 %v456, 536870912
    %v458 = vshrl.u32 %v457, 30
    %v459 = vshll.u32 %v458, 30
    %v460 = vsub.s32 %v456, %v459
    %vm461 = vcmp.lt.s32.totalorder %v460, 0
    %v462 = vsub.s32 0, %v460
    %v463 = vsel %vm461, %v462, %v460
    %v464 = vclz %v463
    %v465 = vsub.s32 %v464, 2
    %vm466 = vcmp.gt.s32.totalorder 0, %v465
    %v467 = vsel %vm466, 0, %v465
    %v468 = vsub.s32 32, %v467
    %v469 = vshll.u32 %v460, %v467
    %v470 = vshrl.u32 %v452, %v468
    %v471 = vor.u32 %v469, %v470
    %v472 = vsub.s32 4294967266, %v467
    %v473 = vadd.s32 %v472, 127
    %v474 = vshll.u32 %v473, 23
    %v475 = vor.u32 4788187, %v474
    %v476 = vand.u32 2147483647, %v475
    %v478 = vcvt.s32.f32 %v471
    %v479 = vmul.f32 %v478, %v476
    %v480 = vxor.u32 %v479, 2147483648
    %v481 = vsel %vm360, %v480, %v479
    %v482 = vsub.s32 4, %v458
    %v483 = vsel %vm360, %v482, %v458
    %v484 = vsel %vm359, %v27, %v481
    %v485 = vsel %vm359, 0, %v483
    %v486 = vmul.f32 %v484, %v484
    %v487 = vmul.f32 %v486, -0.001358992
    %v488 = vadd.f32 %v487, 0.041655596
    %v489 = vmul.f32 %v486, %v488
    %v490 = vadd.f32 %v489, -0.4999988
    %v491 = vmul.f32 %v486, %v490
    %v492 = vadd.f32 1.0, %v491
    %v493 = vmul.f32 %v484, %v484
    %v494 = vmul.f32 %v493, -0.00019511016
    %v495 = vadd.f32 %v494, 0.008332121
    %v496 = vmul.f32 %v493, %v495
    %v497 = vadd.f32 %v496, -0.16666654
    %v498 = vmul.f32 %v493, %v497
    %v499 = vadd.f32 %v498, 1.0
    %v500 = vmul.f32 %v499, %v484
    %vm501 = vweird.f32 %v27
    %v502 = vadd.s32 %v485, 3
    %v503 = vand.u32 %v502, 3
    %vm504 = vcmp.lt.s32.totalorder %v503, 2
    %vm505 = vcmp.eq.s32.totalorder %v503, 0
    %v506 = vxor.u32 %v500, 2147483648
    %v507 = vsel %vm505, %v492, %v506
    %vm508 = vcmp.eq.s32.totalorder %v503, 2
    %v509 = vxor.u32 %v492, 2147483648
    %v510 = vsel %vm508, %v509, %v500
    %v511 = vsel %vm504, %v507, %v510
    %v512 = vsel %vm501, nan, %v511
    %v513 = vand.u32 2147483647, %v28
    %vm514 = vcmp.le.f32.partialorder %v513, 0.7853982
    %vm515 = vcmp.lt.s32.totalorder %v28, 0
    %v516 = vand.u32 %v28, 2139095040
    %v517 = vshrl.u32 %v516, 23
    %v518 = vsub.s32 %v517, 127
    %v519 = vand.u32 2147483647, %v28
    %v520 = vand.u32 %v519, 8388607
    %v521 = vor.u32 %v520, 8388608
    %v522 = vsub.s32 0, %v521
    %v523 = vadd.s32 %v518, 1
    %vm524 = vcmp.gt.s32.totalorder %v523, 0
    %v525 = vsel %vm524, %v523, 0
    %v526 = vshrl.u32 %v525, 5
    %v527 = vand.u32 %v525, 31
    %v528 = vsub.s32 32, %v527
    %v529 = vshrl.u32 683565275, %v528
    %v530 = vshll.u32 683565275, %v527
    %v531 = vshrl.u32 2475754826, %v528
    %v532 = vor.u32 %v530, %v531
    %v533 = vshll.u32 2475754826, %v527
    %v534 = vshrl.u32 2131351028, %v528
    %v535 = vor.u32 %v533, %v534
    %v536 = vshll.u32 2131351028, %v527
    %v537 = vshrl.u32 2102212464, %v528
    %v538 = vor.u32 %v536, %v537
    %v539 = vshll.u32 2102212464, %v527
    %v540 = vshrl.u32 920167782, %v528
    %v541 = vor.u32 %v539, %v540
    %v542 = vshll.u32 920167782, %v527
    %v543 = vshrl.u32 1326507024, %v528
    %v544 = vor.u32 %v542, %v543
    %vm545 = vcmp.lt.s32.totalorder %v526, 1
    %vm546 = vcmp.lt.s32.totalorder %v526, 2
    %vm547 = vcmp.lt.s32.totalorder %v526, 3
    %vm548 = vcmp.lt.s32.totalorder %v526, 4
    %v549 = vsel %vm545, %v529, %v532
    %v550 = vsel %vm548, %v538, 2102212464
    %v551 = vsel %vm547, %v535, %v550
    %v552 = vsel %vm546, %v549, %v551
    %v553 = vsel %vm545, %v532, %v535
    %v554 = vsel %vm548, %v541, 920167782
    %v555 = vsel %vm547, %v538, %v554
    %v556 = vsel %vm546, %v553, %v555
    %v557 = vsel %vm545, %v535, %v538
    %v558 = vsel %vm548, %v544, 1326507024
    %v559 = vsel %vm547, %v541, %v558
    %v560 = vsel %vm546, %v557, %v559
    %v561 = vshll.u32 %v521, 8
    %v562 = vand.u32 %v561, 65535
    %v563 = vshrl.u32 %v561, 16
    %v564 = vand.u32 %v560, 65535
    %v565 = vshrl.u32 %v560, 16
    %v566 = vmul.u32 %v562, %v564
    %v567 = vmul.u32 %v562, %v565
    %v568 = vmul.u32 %v563, %v564
    %v569 = vmul.u32 %v563, %v565
    %v570 = vshll.u32 %v567, 16
    %v571 = vshrl.u32 %v567, 16
    %v572 = vshll.u32 %v568, 16
    %v573 = vshrl.u32 %v568, 16
    %vm574 = vc.u32 %v566, %v570
    %v575 = vsel %vm574, 1, 0
    %v576 = vadd.s32 %v566, %v570
    %v577 = vadd.s32 %v569, %v575
    %vm578 = vc.u32 %v576, %v572
    %v579 = vsel %vm578, 1, 0
    %v580 = vadd.s32 %v576, %v572
    %v581 = vadd.s32 %v577, %v579
    %v582 = vadd.s32 %v581, %v571
    %v583 = vadd.s32 %v582, %v573
    %v584 = vand.u32 %v561, 65535
    %v585 = vshrl.u32 %v561, 16
    %v586 = vand.u32 %v556, 65535
    %v587 = vshrl.u32 %v556, 16
    %v588 = vmul.u32 %v584, %v586
    %v589 = vmul.u32 %v584, %v587
    %v590 = vmul.u32 %v585, %v586
    %v591 = vmul.u32 %v585, %v587
    %v592 = vshll.u32 %v589, 16
    %v593 = vshrl.u32 %v589, 16
    %v594 = vshll.u32 %v590, 16
    %v595 = vshrl.u32 %v590, 16
    %vm596 = vc.u32 %v588, %v592
    %v597 = vsel %vm596, 1, 0
    %v598 = vadd.s32 %v588, %v592
    %v599 = vadd.s32 %v591, %v597
    %vm600 = vc.u32 %v598, %v594
    %v601 = vsel %vm600, 1, 0
    %v602 = vadd.s32 %v598, %v594
    %v603 = vadd.s32 %v599, %v601
    %v604 = vadd.s32 %v603, %v593
    %v605 = vadd.s32 %v604, %v595
    %v606 = vmul.u32 %v561, %v552
    %v607 = vadd.s32 %v583, %v602
    %vm608 = vc.u32 %v583, %v602
    %v609 = vadd.s32 %v605, 1
    %v610 = vsel %vm608, %v609, %v605
    %v611 = vadd.s32 %v606, %v610
    %v612 = vadd.s32 %v611, 536870912
    %v613 = vshrl.u32 %v612, 30
    %v614 = vshll.u32 %v613, 30
    %v615 = vsub.s32 %v611, %v614
    %vm616 = vcmp.lt.s32.totalorder %v615, 0
    %v617 = vsub.s32 0, %v615
    %v618 = vsel %vm616, %v617, %v615
    %v619 = vclz %v618
    %v620 = vsub.s32 %v619, 2
    %vm621 = vcmp.gt.s32.totalorder 0, %v620
    %v622 = vsel %vm621, 0, %v620
    %v623 = vsub.s32 32, %v622
    %v624 = vshll.u32 %v615, %v622
    %v625 = vshrl.u32 %v607, %v623
    %v626 = vor.u32 %v624, %v625
    %v627 = vsub.s32 4294967266, %v622
    %v628 = vadd.s32 %v627, 127
    %v629 = vshll.u32 %v628, 23
    %v630 = vor.u32 4788187, %v629
    %v631 = vand.u32 2147483647, %v630
    %v633 = vcvt.s32.f32 %v626
    %v634 = vmul.f32 %v633, %v631
    %v635 = vxor.u32 %v634, 2147483648
    %v636 = vsel %vm515, %v635, %v634
    %v637 = vsub.s32 4, %v613
    %v638 = vsel %vm515, %v637, %v613
    %v639 = vsel %vm514, %v28, %v636
    %v640 = vsel %vm514, 0, %v638
    %v641 = vmul.f32 %v639, %v639
    %v642 = vmul.f32 %v641, -0.001358992
    %v643 = vadd.f32 %v642, 0.041655596
    %v644 = vmul.f32 %v641, %v643
    %v645 = vadd.f32 %v644, -0.4999988
    %v646 = vmul.f32 %v641, %v645
    %v647 = vadd.f32 1.0, %v646
    %v648 = vmul.f32 %v639, %v639
    %v649 = vmul.f32 %v648, -0.00019511016
    %v650 = vadd.f32 %v649, 0.008332121
    %v651 = vmul.f32 %v648, %v650
    %v652 = vadd.f32 %v651, -0.16666654
    %v653 = vmul.f32 %v648, %v652
    %v654 = vadd.f32 %v653, 1.0
    %v655 = vmul.f32 %v654, %v639
    %vm656 = vweird.f32 %v28
    %v657 = vadd.s32 %v640, 3
    %v658 = vand.u32 %v657, 3
    %vm659 = vcmp.lt.s32.totalorder %v658, 2
    %vm660 = vcmp.eq.s32.totalorder %v658, 0
    %v661 = vxor.u32 %v655, 2147483648
    %v662 = vsel %vm660, %v647, %v661
    %vm663 = vcmp.eq.s32.totalorder %v658, 2
    %v664 = vxor.u32 %v647, 2147483648
    %v665 = vsel %vm663, %v664, %v655
    %v666 = vsel %vm659, %v662, %v665
    %v667 = vsel %vm656, nan, %v666
    %v668 = vand.u32 2147483647, %v29
    %vm669 = vcmp.le.f32.partialorder %v668, 0.7853982
    %vm670 = vcmp.lt.s32.totalorder %v29, 0
    %v671 = vand.u32 %v29, 2139095040
    %v672 = vshrl.u32 %v671, 23
    %v673 = vsub.s32 %v672, 127
    %v674 = vand.u32 2147483647, %v29
    %v675 = vand.u32 %v674, 8388607
    %v676 = vor.u32 %v675, 8388608
    %v677 = vsub.s32 0, %v676
    %v678 = vadd.s32 %v673, 1
    %vm679 = vcmp.gt.s32.totalorder %v678, 0
    %v680 = vsel %vm679, %v678, 0
    %v681 = vshrl.u32 %v680, 5
    %v682 = vand.u32 %v680, 31
    %v683 = vsub.s32 32, %v682
    %v684 = vshrl.u32 683565275, %v683
    %v685 = vshll.u32 683565275, %v682
    %v686 = vshrl.u32 2475754826, %v683
    %v687 = vor.u32 %v685, %v686
    %v688 = vshll.u32 2475754826, %v682
    %v689 = vshrl.u32 2131351028, %v683
    %v690 = vor.u32 %v688, %v689
    %v691 = vshll.u32 2131351028, %v682
    %v692 = vshrl.u32 2102212464, %v683
    %v693 = vor.u32 %v691, %v692
    %v694 = vshll.u32 2102212464, %v682
    %v695 = vshrl.u32 920167782, %v683
    %v696 = vor.u32 %v694, %v695
    %v697 = vshll.u32 920167782, %v682
    %v698 = vshrl.u32 1326507024, %v683
    %v699 = vor.u32 %v697, %v698
    %vm700 = vcmp.lt.s32.totalorder %v681, 1
    %vm701 = vcmp.lt.s32.totalorder %v681, 2
    %vm702 = vcmp.lt.s32.totalorder %v681, 3
    %vm703 = vcmp.lt.s32.totalorder %v681, 4
    %v704 = vsel %vm700, %v684, %v687
    %v705 = vsel %vm703, %v693, 2102212464
    %v706 = vsel %vm702, %v690, %v705
    %v707 = vsel %vm701, %v704, %v706
    %v708 = vsel %vm700, %v687, %v690
    %v709 = vsel %vm703, %v696, 920167782
    %v710 = vsel %vm702, %v693, %v709
    %v711 = vsel %vm701, %v708, %v710
    %v712 = vsel %vm700, %v690, %v693
    %v713 = vsel %vm703, %v699, 1326507024
    %v714 = vsel %vm702, %v696, %v713
    %v715 = vsel %vm701, %v712, %v714
    %v716 = vshll.u32 %v676, 8
    %v717 = vand.u32 %v716, 65535
    %v718 = vshrl.u32 %v716, 16
    %v719 = vand.u32 %v715, 65535
    %v720 = vshrl.u32 %v715, 16
    %v721 = vmul.u32 %v717, %v719
    %v722 = vmul.u32 %v717, %v720
    %v723 = vmul.u32 %v718, %v719
    %v724 = vmul.u32 %v718, %v720
    %v725 = vshll.u32 %v722, 16
    %v726 = vshrl.u32 %v722, 16
    %v727 = vshll.u32 %v723, 16
    %v728 = vshrl.u32 %v723, 16
    %vm729 = vc.u32 %v721, %v725
    %v730 = vsel %vm729, 1, 0
    %v731 = vadd.s32 %v721, %v725
    %v732 = vadd.s32 %v724, %v730
    %vm733 = vc.u32 %v731, %v727
    %v734 = vsel %vm733, 1, 0
    %v735 = vadd.s32 %v731, %v727
    %v736 = vadd.s32 %v732, %v734
    %v737 = vadd.s32 %v736, %v726
    %v738 = vadd.s32 %v737, %v728
    %v739 = vand.u32 %v716, 65535
    %v740 = vshrl.u32 %v716, 16
    %v741 = vand.u32 %v711, 65535
    %v742 = vshrl.u32 %v711, 16
    %v743 = vmul.u32 %v739, %v741
    %v744 = vmul.u32 %v739, %v742
    %v745 = vmul.u32 %v740, %v741
    %v746 = vmul.u32 %v740, %v742
    %v747 = vshll.u32 %v744, 16
    %v748 = vshrl.u32 %v744, 16
    %v749 = vshll.u32 %v745, 16
    %v750 = vshrl.u32 %v745, 16
    %vm751 = vc.u32 %v743, %v747
    %v752 = vsel %vm751, 1, 0
    %v753 = vadd.s32 %v743, %v747
    %v754 = vadd.s32 %v746, %v752
    %vm755 = vc.u32 %v753, %v749
    %v756 = vsel %vm755, 1, 0
    %v757 = vadd.s32 %v753, %v749
    %v758 = vadd.s32 %v754, %v756
    %v759 = vadd.s32 %v758, %v748
    %v760 = vadd.s32 %v759, %v750
    %v761 = vmul.u32 %v716, %v707
    %v762 = vadd.s32 %v738, %v757
    %vm763 = vc.u32 %v738, %v757
    %v764 = vadd.s32 %v760, 1
    %v765 = vsel %vm763, %v764, %v760
    %v766 = vadd.s32 %v761, %v765
    %v767 = vadd.s32 %v766, 536870912
    %v768 = vshrl.u32 %v767, 30
    %v769 = vshll.u32 %v768, 30
    %v770 = vsub.s32 %v766, %v769
    %vm771 = vcmp.lt.s32.totalorder %v770, 0
    %v772 = vsub.s32 0, %v770
    %v773 = vsel %vm771, %v772, %v770
    %v774 = vclz %v773
    %v775 = vsub.s32 %v774, 2
    %vm776 = vcmp.gt.s32.totalorder 0, %v775
    %v777 = vsel %vm776, 0, %v775
    %v778 = vsub.s32 32, %v777
    %v779 = vshll.u32 %v770, %v777
    %v780 = vshrl.u32 %v762, %v778
    %v781 = vor.u32 %v779, %v780
    %v782 = vsub.s32 4294967266, %v777
    %v783 = vadd.s32 %v782, 127
    %v784 = vshll.u32 %v783, 23
    %v785 = vor.u32 4788187, %v784
    %v786 = vand.u32 2147483647, %v785
    %v788 = vcvt.s32.f32 %v781
    %v789 = vmul.f32 %v788, %v786
    %v790 = vxor.u32 %v789, 2147483648
    %v791 = vsel %vm670, %v790, %v789
    %v792 = vsub.s32 4, %v768
    %v793 = vsel %vm670, %v792, %v768
    %v794 = vsel %vm669, %v29, %v791
    %v795 = vsel %vm669, 0, %v793
    %v796 = vmul.f32 %v794, %v794
    %v797 = vmul.f32 %v796, -0.001358992
    %v798 = vadd.f32 %v797, 0.041655596
    %v799 = vmul.f32 %v796, %v798
    %v800 = vadd.f32 %v799, -0.4999988
    %v801 = vmul.f32 %v796, %v800
    %v802 = vadd.f32 1.0, %v801
    %v803 = vmul.f32 %v794, %v794
    %v804 = vmul.f32 %v803, -0.00019511016
    %v805 = vadd.f32 %v804, 0.008332121
    %v806 = vmul.f32 %v803, %v805
    %v807 = vadd.f32 %v806, -0.16666654
    %v808 = vmul.f32 %v803, %v807
    %v809 = vadd.f32 %v808, 1.0
    %v810 = vmul.f32 %v809, %v794
    %vm811 = vweird.f32 %v29
    %v812 = vadd.s32 %v795, 3
    %v813 = vand.u32 %v812, 3
    %vm814 = vcmp.lt.s32.totalorder %v813, 2
    %vm815 = vcmp.eq.s32.totalorder %v813, 0
    %v816 = vxor.u32 %v810, 2147483648
    %v817 = vsel %vm815, %v802, %v816
    %vm818 = vcmp.eq.s32.totalorder %v813, 2
    %v819 = vxor.u32 %v802, 2147483648
    %v820 = vsel %vm818, %v819, %v810
    %v821 = vsel %vm814, %v817, %v820
    %v822 = vsel %vm811, nan, %v821
    %v823 = vand.u32 2147483647, %v30
    %vm824 = vcmp.le.f32.partialorder %v823, 0.7853982
    %vm825 = vcmp.lt.s32.totalorder %v30, 0
    %v826 = vand.u32 %v30, 2139095040
    %v827 = vshrl.u32 %v826, 23
    %v828 = vsub.s32 %v827, 127
    %v829 = vand.u32 2147483647, %v30
    %v830 = vand.u32 %v829, 8388607
    %v831 = vor.u32 %v830, 8388608
    %v832 = vsub.s32 0, %v831
    %v833 = vadd.s32 %v828, 1
    %vm834 = vcmp.gt.s32.totalorder %v833, 0
    %v835 = vsel %vm834, %v833, 0
    %v836 = vshrl.u32 %v835, 5
    %v837 = vand.u32 %v835, 31
    %v838 = vsub.s32 32, %v837
    %v839 = vshrl.u32 683565275, %v838
    %v840 = vshll.u32 683565275, %v837
    %v841 = vshrl.u32 2475754826, %v838
    %v842 = vor.u32 %v840, %v841
    %v843 = vshll.u32 2475754826, %v837
    %v844 = vshrl.u32 2131351028, %v838
    %v845 = vor.u32 %v843, %v844
    %v846 = vshll.u32 2131351028, %v837
    %v847 = vshrl.u32 2102212464, %v838
    %v848 = vor.u32 %v846, %v847
    %v849 = vshll.u32 2102212464, %v837
    %v850 = vshrl.u32 920167782, %v838
    %v851 = vor.u32 %v849, %v850
    %v852 = vshll.u32 920167782, %v837
    %v853 = vshrl.u32 1326507024, %v838
    %v854 = vor.u32 %v852, %v853
    %vm855 = vcmp.lt.s32.totalorder %v836, 1
    %vm856 = vcmp.lt.s32.totalorder %v836, 2
    %vm857 = vcmp.lt.s32.totalorder %v836, 3
    %vm858 = vcmp.lt.s32.totalorder %v836, 4
    %v859 = vsel %vm855, %v839, %v842
    %v860 = vsel %vm858, %v848, 2102212464
    %v861 = vsel %vm857, %v845, %v860
    %v862 = vsel %vm856, %v859, %v861
    %v863 = vsel %vm855, %v842, %v845
    %v864 = vsel %vm858, %v851, 920167782
    %v865 = vsel %vm857, %v848, %v864
    %v866 = vsel %vm856, %v863, %v865
    %v867 = vsel %vm855, %v845, %v848
    %v868 = vsel %vm858, %v854, 1326507024
    %v869 = vsel %vm857, %v851, %v868
    %v870 = vsel %vm856, %v867, %v869
    %v871 = vshll.u32 %v831, 8
    %v872 = vand.u32 %v871, 65535
    %v873 = vshrl.u32 %v871, 16
    %v874 = vand.u32 %v870, 65535
    %v875 = vshrl.u32 %v870, 16
    %v876 = vmul.u32 %v872, %v874
    %v877 = vmul.u32 %v872, %v875
    %v878 = vmul.u32 %v873, %v874
    %v879 = vmul.u32 %v873, %v875
    %v880 = vshll.u32 %v877, 16
    %v881 = vshrl.u32 %v877, 16
    %v882 = vshll.u32 %v878, 16
    %v883 = vshrl.u32 %v878, 16
    %vm884 = vc.u32 %v876, %v880
    %v885 = vsel %vm884, 1, 0
    %v886 = vadd.s32 %v876, %v880
    %v887 = vadd.s32 %v879, %v885
    %vm888 = vc.u32 %v886, %v882
    %v889 = vsel %vm888, 1, 0
    %v890 = vadd.s32 %v886, %v882
    %v891 = vadd.s32 %v887, %v889
    %v892 = vadd.s32 %v891, %v881
    %v893 = vadd.s32 %v892, %v883
    %v894 = vand.u32 %v871, 65535
    %v895 = vshrl.u32 %v871, 16
    %v896 = vand.u32 %v866, 65535
    %v897 = vshrl.u32 %v866, 16
    %v898 = vmul.u32 %v894, %v896
    %v899 = vmul.u32 %v894, %v897
    %v900 = vmul.u32 %v895, %v896
    %v901 = vmul.u32 %v895, %v897
    %v902 = vshll.u32 %v899, 16
    %v903 = vshrl.u32 %v899, 16
    %v904 = vshll.u32 %v900, 16
    %v905 = vshrl.u32 %v900, 16
    %vm906 = vc.u32 %v898, %v902
    %v907 = vsel %vm906, 1, 0
    %v908 = vadd.s32 %v898, %v902
    %v909 = vadd.s32 %v901, %v907
    %vm910 = vc.u32 %v908, %v904
    %v911 = vsel %vm910, 1, 0
    %v912 = vadd.s32 %v908, %v904
    %v913 = vadd.s32 %v909, %v911
    %v914 = vadd.s32 %v913, %v903
    %v915 = vadd.s32 %v914, %v905
    %v916 = vmul.u32 %v871, %v862
    %v917 = vadd.s32 %v893, %v912
    %vm918 = vc.u32 %v893, %v912
    %v919 = vadd.s32 %v915, 1
    %v920 = vsel %vm918, %v919, %v915
    %v921 = vadd.s32 %v916, %v920
    %v922 = vadd.s32 %v921, 536870912
    %v923 = vshrl.u32 %v922, 30
    %v924 = vshll.u32 %v923, 30
    %v925 = vsub.s32 %v921, %v924
    %vm926 = vcmp.lt.s32.totalorder %v925, 0
    %v927 = vsub.s32 0, %v925
    %v928 = vsel %vm926, %v927, %v925
    %v929 = vclz %v928
    %v930 = vsub.s32 %v929, 2
    %vm931 = vcmp.gt.s32.totalorder 0, %v930
    %v932 = vsel %vm931, 0, %v930
    %v933 = vsub.s32 32, %v932
    %v934 = vshll.u32 %v925, %v932
    %v935 = vshrl.u32 %v917, %v933
    %v936 = vor.u32 %v934, %v935
    %v937 = vsub.s32 4294967266, %v932
    %v938 = vadd.s32 %v937, 127
    %v939 = vshll.u32 %v938, 23
    %v940 = vor.u32 4788187, %v939
    %v941 = vand.u32 2147483647, %v940
    %v943 = vcvt.s32.f32 %v936
    %v944 = vmul.f32 %v943, %v941
    %v945 = vxor.u32 %v944, 2147483648
    %v946 = vsel %vm825, %v945, %v944
    %v947 = vsub.s32 4, %v923
    %v948 = vsel %vm825, %v947, %v923
    %v949 = vsel %vm824, %v30, %v946
    %v950 = vsel %vm824, 0, %v948
    %v951 = vmul.f32 %v949, %v949
    %v952 = vmul.f32 %v951, -0.001358992
    %v953 = vadd.f32 %v952, 0.041655596
    %v954 = vmul.f32 %v951, %v953
    %v955 = vadd.f32 %v954, -0.4999988
    %v956 = vmul.f32 %v951, %v955
    %v957 = vadd.f32 1.0, %v956
    %v958 = vmul.f32 %v949, %v949
    %v959 = vmul.f32 %v958, -0.00019511016
    %v960 = vadd.f32 %v959, 0.008332121
    %v961 = vmul.f32 %v958, %v960
    %v962 = vadd.f32 %v961, -0.16666654
    %v963 = vmul.f32 %v958, %v962
    %v964 = vadd.f32 %v963, 1.0
    %v965 = vmul.f32 %v964, %v949
    %vm966 = vweird.f32 %v30
    %v967 = vadd.s32 %v950, 3
    %v968 = vand.u32 %v967, 3
    %vm969 = vcmp.lt.s32.totalorder %v968, 2
    %vm970 = vcmp.eq.s32.totalorder %v968, 0
    %v971 = vxor.u32 %v965, 2147483648
    %v972 = vsel %vm970, %v957, %v971
    %vm973 = vcmp.eq.s32.totalorder %v968, 2
    %v974 = vxor.u32 %v957, 2147483648
    %v975 = vsel %vm973, %v974, %v965
    %v976 = vsel %vm969, %v972, %v975
    %v977 = vsel %vm966, nan, %v976
    %v978 = vand.u32 2147483647, %v31
    %vm979 = vcmp.le.f32.partialorder %v978, 0.7853982
    %vm980 = vcmp.lt.s32.totalorder %v31, 0
    %v981 = vand.u32 %v31, 2139095040
    %v982 = vshrl.u32 %v981, 23
    %v983 = vsub.s32 %v982, 127
    %v984 = vand.u32 2147483647, %v31
    %v985 = vand.u32 %v984, 8388607
    %v986 = vor.u32 %v985, 8388608
    %v987 = vsub.s32 0, %v986
    %v988 = vadd.s32 %v983, 1
    %vm989 = vcmp.gt.s32.totalorder %v988, 0
    %v990 = vsel %vm989, %v988, 0
    %v991 = vshrl.u32 %v990, 5
    %v992 = vand.u32 %v990, 31
    %v993 = vsub.s32 32, %v992
    %v994 = vshrl.u32 683565275, %v993
    %v995 = vshll.u32 683565275, %v992
    %v996 = vshrl.u32 2475754826, %v993
    %v997 = vor.u32 %v995, %v996
    %v998 = vshll.u32 2475754826, %v992
    %v999 = vshrl.u32 2131351028, %v993
    %v1000 = vor.u32 %v998, %v999
    %v1001 = vshll.u32 2131351028, %v992
    %v1002 = vshrl.u32 2102212464, %v993
    %v1003 = vor.u32 %v1001, %v1002
    %v1004 = vshll.u32 2102212464, %v992
    %v1005 = vshrl.u32 920167782, %v993
    %v1006 = vor.u32 %v1004, %v1005
    %v1007 = vshll.u32 920167782, %v992
    %v1008 = vshrl.u32 1326507024, %v993
    %v1009 = vor.u32 %v1007, %v1008
    %vm1010 = vcmp.lt.s32.totalorder %v991, 1
    %vm1011 = vcmp.lt.s32.totalorder %v991, 2
    %vm1012 = vcmp.lt.s32.totalorder %v991, 3
    %vm1013 = vcmp.lt.s32.totalorder %v991, 4
    %v1014 = vsel %vm1010, %v994, %v997
    %v1015 = vsel %vm1013, %v1003, 2102212464
    %v1016 = vsel %vm1012, %v1000, %v1015
    %v1017 = vsel %vm1011, %v1014, %v1016
    %v1018 = vsel %vm1010, %v997, %v1000
    %v1019 = vsel %vm1013, %v1006, 920167782
    %v1020 = vsel %vm1012, %v1003, %v1019
    %v1021 = vsel %vm1011, %v1018, %v1020
    %v1022 = vsel %vm1010, %v1000, %v1003
    %v1023 = vsel %vm1013, %v1009, 1326507024
    %v1024 = vsel %vm1012, %v1006, %v1023
    %v1025 = vsel %vm1011, %v1022, %v1024
    %v1026 = vshll.u32 %v986, 8
    %v1027 = vand.u32 %v1026, 65535
    %v1028 = vshrl.u32 %v1026, 16
    %v1029 = vand.u32 %v1025, 65535
    %v1030 = vshrl.u32 %v1025, 16
    %v1031 = vmul.u32 %v1027, %v1029
    %v1032 = vmul.u32 %v1027, %v1030
    %v1033 = vmul.u32 %v1028, %v1029
    %v1034 = vmul.u32 %v1028, %v1030
    %v1035 = vshll.u32 %v1032, 16
    %v1036 = vshrl.u32 %v1032, 16
    %v1037 = vshll.u32 %v1033, 16
    %v1038 = vshrl.u32 %v1033, 16
    %vm1039 = vc.u32 %v1031, %v1035
    %v1040 = vsel %vm1039, 1, 0
    %v1041 = vadd.s32 %v1031, %v1035
    %v1042 = vadd.s32 %v1034, %v1040
    %vm1043 = vc.u32 %v1041, %v1037
    %v1044 = vsel %vm1043, 1, 0
    %v1045 = vadd.s32 %v1041, %v1037
    %v1046 = vadd.s32 %v1042, %v1044
    %v1047 = vadd.s32 %v1046, %v1036
    %v1048 = vadd.s32 %v1047, %v1038
    %v1049 = vand.u32 %v1026, 65535
    %v1050 = vshrl.u32 %v1026, 16
    %v1051 = vand.u32 %v1021, 65535
    %v1052 = vshrl.u32 %v1021, 16
    %v1053 = vmul.u32 %v1049, %v1051
    %v1054 = vmul.u32 %v1049, %v1052
    %v1055 = vmul.u32 %v1050, %v1051
    %v1056 = vmul.u32 %v1050, %v1052
    %v1057 = vshll.u32 %v1054, 16
    %v1058 = vshrl.u32 %v1054, 16
    %v1059 = vshll.u32 %v1055, 16
    %v1060 = vshrl.u32 %v1055, 16
    %vm1061 = vc.u32 %v1053, %v1057
    %v1062 = vsel %vm1061, 1, 0
    %v1063 = vadd.s32 %v1053, %v1057
    %v1064 = vadd.s32 %v1056, %v1062
    %vm1065 = vc.u32 %v1063, %v1059
    %v1066 = vsel %vm1065, 1, 0
    %v1067 = vadd.s32 %v1063, %v1059
    %v1068 = vadd.s32 %v1064, %v1066
    %v1069 = vadd.s32 %v1068, %v1058
    %v1070 = vadd.s32 %v1069, %v1060
    %v1071 = vmul.u32 %v1026, %v1017
    %v1072 = vadd.s32 %v1048, %v1067
    %vm1073 = vc.u32 %v1048, %v1067
    %v1074 = vadd.s32 %v1070, 1
    %v1075 = vsel %vm1073, %v1074, %v1070
    %v1076 = vadd.s32 %v1071, %v1075
    %v1077 = vadd.s32 %v1076, 536870912
    %v1078 = vshrl.u32 %v1077, 30
    %v1079 = vshll.u32 %v1078, 30
    %v1080 = vsub.s32 %v1076, %v1079
    %vm1081 = vcmp.lt.s32.totalorder %v1080, 0
    %v1082 = vsub.s32 0, %v1080
    %v1083 = vsel %vm1081, %v1082, %v1080
    %v1084 = vclz %v1083
    %v1085 = vsub.s32 %v1084, 2
    %vm1086 = vcmp.gt.s32.totalorder 0, %v1085
    %v1087 = vsel %vm1086, 0, %v1085
    %v1088 = vsub.s32 32, %v1087
    %v1089 = vshll.u32 %v1080, %v1087
    %v1090 = vshrl.u32 %v1072, %v1088
    %v1091 = vor.u32 %v1089, %v1090
    %v1092 = vsub.s32 4294967266, %v1087
    %v1093 = vadd.s32 %v1092, 127
    %v1094 = vshll.u32 %v1093, 23
    %v1095 = vor.u32 4788187, %v1094
    %v1096 = vand.u32 2147483647, %v1095
    %v1098 = vcvt.s32.f32 %v1091
    %v1099 = vmul.f32 %v1098, %v1096
    %v1100 = vxor.u32 %v1099, 2147483648
    %v1101 = vsel %vm980, %v1100, %v1099
    %v1102 = vsub.s32 4, %v1078
    %v1103 = vsel %vm980, %v1102, %v1078
    %v1104 = vsel %vm979, %v31, %v1101
    %v1105 = vsel %vm979, 0, %v1103
    %v1106 = vmul.f32 %v1104, %v1104
    %v1107 = vmul.f32 %v1106, -0.001358992
    %v1108 = vadd.f32 %v1107, 0.041655596
    %v1109 = vmul.f32 %v1106, %v1108
    %v1110 = vadd.f32 %v1109, -0.4999988
    %v1111 = vmul.f32 %v1106, %v1110
    %v1112 = vadd.f32 1.0, %v1111
    %v1113 = vmul.f32 %v1104, %v1104
    %v1114 = vmul.f32 %v1113, -0.00019511016
    %v1115 = vadd.f32 %v1114, 0.008332121
    %v1116 = vmul.f32 %v1113, %v1115
    %v1117 = vadd.f32 %v1116, -0.16666654
    %v1118 = vmul.f32 %v1113, %v1117
    %v1119 = vadd.f32 %v1118, 1.0
    %v1120 = vmul.f32 %v1119, %v1104
    %vm1121 = vweird.f32 %v31
    %v1122 = vadd.s32 %v1105, 3
    %v1123 = vand.u32 %v1122, 3
    %vm1124 = vcmp.lt.s32.totalorder %v1123, 2
    %vm1125 = vcmp.eq.s32.totalorder %v1123, 0
    %v1126 = vxor.u32 %v1120, 2147483648
    %v1127 = vsel %vm1125, %v1112, %v1126
    %vm1128 = vcmp.eq.s32.totalorder %v1123, 2
    %v1129 = vxor.u32 %v1112, 2147483648
    %v1130 = vsel %vm1128, %v1129, %v1120
    %v1131 = vsel %vm1124, %v1127, %v1130
    %v1132 = vsel %vm1121, nan, %v1131
    %v1133 = vand.u32 2147483647, %v32
    %vm1134 = vcmp.le.f32.partialorder %v1133, 0.7853982
    %vm1135 = vcmp.lt.s32.totalorder %v32, 0
    %v1136 = vand.u32 %v32, 2139095040
    %v1137 = vshrl.u32 %v1136, 23
    %v1138 = vsub.s32 %v1137, 127
    %v1139 = vand.u32 2147483647, %v32
    %v1140 = vand.u32 %v1139, 8388607
    %v1141 = vor.u32 %v1140, 8388608
    %v1142 = vsub.s32 0, %v1141
    %v1143 = vadd.s32 %v1138, 1
    %vm1144 = vcmp.gt.s32.totalorder %v1143, 0
    %v1145 = vsel %vm1144, %v1143, 0
    %v1146 = vshrl.u32 %v1145, 5
    %v1147 = vand.u32 %v1145, 31
    %v1148 = vsub.s32 32, %v1147
    %v1149 = vshrl.u32 683565275, %v1148
    %v1150 = vshll.u32 683565275, %v1147
    %v1151 = vshrl.u32 2475754826, %v1148
    %v1152 = vor.u32 %v1150, %v1151
    %v1153 = vshll.u32 2475754826, %v1147
    %v1154 = vshrl.u32 2131351028, %v1148
    %v1155 = vor.u32 %v1153, %v1154
    %v1156 = vshll.u32 2131351028, %v1147
    %v1157 = vshrl.u32 2102212464, %v1148
    %v1158 = vor.u32 %v1156, %v1157
    %v1159 = vshll.u32 2102212464, %v1147
    %v1160 = vshrl.u32 920167782, %v1148
    %v1161 = vor.u32 %v1159, %v1160
    %v1162 = vshll.u32 920167782, %v1147
    %v1163 = vshrl.u32 1326507024, %v1148
    %v1164 = vor.u32 %v1162, %v1163
    %vm1165 = vcmp.lt.s32.totalorder %v1146, 1
    %vm1166 = vcmp.lt.s32.totalorder %v1146, 2
    %vm1167 = vcmp.lt.s32.totalorder %v1146, 3
    %vm1168 = vcmp.lt.s32.totalorder %v1146, 4
    %v1169 = vsel %vm1165, %v1149, %v1152
    %v1170 = vsel %vm1168, %v1158, 2102212464
    %v1171 = vsel %vm1167, %v1155, %v1170
    %v1172 = vsel %vm1166, %v1169, %v1171
    %v1173 = vsel %vm1165, %v1152, %v1155
    %v1174 = vsel %vm1168, %v1161, 920167782
    %v1175 = vsel %vm1167, %v1158, %v1174
    %v1176 = vsel %vm1166, %v1173, %v1175
    %v1177 = vsel %vm1165, %v1155, %v1158
    %v1178 = vsel %vm1168, %v1164, 1326507024
    %v1179 = vsel %vm1167, %v1161, %v1178
    %v1180 = vsel %vm1166, %v1177, %v1179
    %v1181 = vshll.u32 %v1141, 8
    %v1182 = vand.u32 %v1181, 65535
    %v1183 = vshrl.u32 %v1181, 16
    %v1184 = vand.u32 %v1180, 65535
    %v1185 = vshrl.u32 %v1180, 16
    %v1186 = vmul.u32 %v1182, %v1184
    %v1187 = vmul.u32 %v1182, %v1185
    %v1188 = vmul.u32 %v1183, %v1184
    %v1189 = vmul.u32 %v1183, %v1185
    %v1190 = vshll.u32 %v1187, 16
    %v1191 = vshrl.u32 %v1187, 16
    %v1192 = vshll.u32 %v1188, 16
    %v1193 = vshrl.u32 %v1188, 16
    %vm1194 = vc.u32 %v1186, %v1190
    %v1195 = vsel %vm1194, 1, 0
    %v1196 = vadd.s32 %v1186, %v1190
    %v1197 = vadd.s32 %v1189, %v1195
    %vm1198 = vc.u32 %v1196, %v1192
    %v1199 = vsel %vm1198, 1, 0
    %v1200 = vadd.s32 %v1196, %v1192
    %v1201 = vadd.s32 %v1197, %v1199
    %v1202 = vadd.s32 %v1201, %v1191
    %v1203 = vadd.s32 %v1202, %v1193
    %v1204 = vand.u32 %v1181, 65535
    %v1205 = vshrl.u32 %v1181, 16
    %v1206 = vand.u32 %v1176, 65535
    %v1207 = vshrl.u32 %v1176, 16
    %v1208 = vmul.u32 %v1204, %v1206
    %v1209 = vmul.u32 %v1204, %v1207
    %v1210 = vmul.u32 %v1205, %v1206
    %v1211 = vmul.u32 %v1205, %v1207
    %v1212 = vshll.u32 %v1209, 16
    %v1213 = vshrl.u32 %v1209, 16
    %v1214 = vshll.u32 %v1210, 16
    %v1215 = vshrl.u32 %v1210, 16
    %vm1216 = vc.u32 %v1208, %v1212
    %v1217 = vsel %vm1216, 1, 0
    %v1218 = vadd.s32 %v1208, %v1212
    %v1219 = vadd.s32 %v1211, %v1217
    %vm1220 = vc.u32 %v1218, %v1214
    %v1221 = vsel %vm1220, 1, 0
    %v1222 = vadd.s32 %v1218, %v1214
    %v1223 = vadd.s32 %v1219, %v1221
    %v1224 = vadd.s32 %v1223, %v1213
    %v1225 = vadd.s32 %v1224, %v1215
    %v1226 = vmul.u32 %v1181, %v1172
    %v1227 = vadd.s32 %v1203, %v1222
    %vm1228 = vc.u32 %v1203, %v1222
    %v1229 = vadd.s32 %v1225, 1
    %v1230 = vsel %vm1228, %v1229, %v1225
    %v1231 = vadd.s32 %v1226, %v1230
    %v1232 = vadd.s32 %v1231, 536870912
    %v1233 = vshrl.u32 %v1232, 30
    %v1234 = vshll.u32 %v1233, 30
    %v1235 = vsub.s32 %v1231, %v1234
    %vm1236 = vcmp.lt.s32.totalorder %v1235, 0
    %v1237 = vsub.s32 0, %v1235
    %v1238 = vsel %vm1236, %v1237, %v1235
    %v1239 = vclz %v1238
    %v1240 = vsub.s32 %v1239, 2
    %vm1241 = vcmp.gt.s32.totalorder 0, %v1240
    %v1242 = vsel %vm1241, 0, %v1240
    %v1243 = vsub.s32 32, %v1242
    %v1244 = vshll.u32 %v1235, %v1242
    %v1245 = vshrl.u32 %v1227, %v1243
    %v1246 = vor.u32 %v1244, %v1245
    %v1247 = vsub.s32 4294967266, %v1242
    %v1248 = vadd.s32 %v1247, 127
    %v1249 = vshll.u32 %v1248, 23
    %v1250 = vor.u32 4788187, %v1249
    %v1251 = vand.u32 2147483647, %v1250
    %v1253 = vcvt.s32.f32 %v1246
    %v1254 = vmul.f32 %v1253, %v1251
    %v1255 = vxor.u32 %v1254, 2147483648
    %v1256 = vsel %vm1135, %v1255, %v1254
    %v1257 = vsub.s32 4, %v1233
    %v1258 = vsel %vm1135, %v1257, %v1233
    %v1259 = vsel %vm1134, %v32, %v1256
    %v1260 = vsel %vm1134, 0, %v1258
    %v1261 = vmul.f32 %v1259, %v1259
    %v1262 = vmul.f32 %v1261, -0.001358992
    %v1263 = vadd.f32 %v1262, 0.041655596
    %v1264 = vmul.f32 %v1261, %v1263
    %v1265 = vadd.f32 %v1264, -0.4999988
    %v1266 = vmul.f32 %v1261, %v1265
    %v1267 = vadd.f32 1.0, %v1266
    %v1268 = vmul.f32 %v1259, %v1259
    %v1269 = vmul.f32 %v1268, -0.00019511016
    %v1270 = vadd.f32 %v1269, 0.008332121
    %v1271 = vmul.f32 %v1268, %v1270
    %v1272 = vadd.f32 %v1271, -0.16666654
    %v1273 = vmul.f32 %v1268, %v1272
    %v1274 = vadd.f32 %v1273, 1.0
    %v1275 = vmul.f32 %v1274, %v1259
    %vm1276 = vweird.f32 %v32
    %v1277 = vadd.s32 %v1260, 3
    %v1278 = vand.u32 %v1277, 3
    %vm1279 = vcmp.lt.s32.totalorder %v1278, 2
    %vm1280 = vcmp.eq.s32.totalorder %v1278, 0
    %v1281 = vxor.u32 %v1275, 2147483648
    %v1282 = vsel %vm1280, %v1267, %v1281
    %vm1283 = vcmp.eq.s32.totalorder %v1278, 2
    %v1284 = vxor.u32 %v1267, 2147483648
    %v1285 = vsel %vm1283, %v1284, %v1275
    %v1286 = vsel %vm1279, %v1282, %v1285
    %v1287 = vsel %vm1276, nan, %v1286
    %v1288 = vsel %vm47, %v25, %v202
    %v1289 = vsel %vm47, %v26, %v357
    %v1290 = vsel %vm47, %v27, %v512
    %v1291 = vsel %vm47, %v28, %v667
    %v1292 = vsel %vm47, %v29, %v822
    %v1293 = vsel %vm47, %v30, %v977
    %v1294 = vsel %vm47, %v31, %v1132
    %v1295 = vsel %vm47, %v32, %v1287
    %1296 = vrot.lane.b32.xlu0 %v1288, 1
    %v1297 = vpop.permute.xlu0 %1296
    %1298 = vrot.lane.b32.xlu0 %v1289, 1
    %v1299 = vpop.permute.xlu0 %1298
    %1300 = vrot.lane.b32.xlu0 %v1290, 1
    %v1301 = vpop.permute.xlu0 %1300
    %1302 = vrot.lane.b32.xlu0 %v1291, 1
    %v1303 = vpop.permute.xlu0 %1302
    %1304 = vrot.lane.b32.xlu0 %v1292, 1
    %v1305 = vpop.permute.xlu0 %1304
    %1306 = vrot.lane.b32.xlu0 %v1293, 1
    %v1307 = vpop.permute.xlu0 %1306
    %1308 = vrot.lane.b32.xlu0 %v1294, 1
    %v1309 = vpop.permute.xlu0 %1308
    %1310 = vrot.lane.b32.xlu0 %v1295, 1
    %v1311 = vpop.permute.xlu0 %1310
    %vm1312 = vcmp.ge.s32.totalorder %v46, 1
    %v1313 = vmul.f32 %v1288, %v1297
    %v1314 = vmul.f32 %v1289, %v1299
    %v1315 = vmul.f32 %v1290, %v1301
    %v1316 = vmul.f32 %v1291, %v1303
    %v1317 = vmul.f32 %v1292, %v1305
    %v1318 = vmul.f32 %v1293, %v1307
    %v1319 = vmul.f32 %v1294, %v1309
    %v1320 = vmul.f32 %v1295, %v1311
    %v1321 = vsel %vm1312, %v1313, %v1288
    %v1322 = vsel %vm1312, %v1314, %v1289
    %v1323 = vsel %vm1312, %v1315, %v1290
    %v1324 = vsel %vm1312, %v1316, %v1291
    %v1325 = vsel %vm1312, %v1317, %v1292
    %v1326 = vsel %vm1312, %v1318, %v1293
    %v1327 = vsel %vm1312, %v1319, %v1294
    %v1328 = vsel %vm1312, %v1320, %v1295
    %1329 = vrot.lane.b32.xlu0 %v1321, 2
    %v1330 = vpop.permute.xlu0 %1329
    %1331 = vrot.lane.b32.xlu0 %v1322, 2
    %v1332 = vpop.permute.xlu0 %1331
    %1333 = vrot.lane.b32.xlu0 %v1323, 2
    %v1334 = vpop.permute.xlu0 %1333
    %1335 = vrot.lane.b32.xlu0 %v1324, 2
    %v1336 = vpop.permute.xlu0 %1335
    %1337 = vrot.lane.b32.xlu0 %v1325, 2
    %v1338 = vpop.permute.xlu0 %1337
    %1339 = vrot.lane.b32.xlu0 %v1326, 2
    %v1340 = vpop.permute.xlu0 %1339
    %1341 = vrot.lane.b32.xlu0 %v1327, 2
    %v1342 = vpop.permute.xlu0 %1341
    %1343 = vrot.lane.b32.xlu0 %v1328, 2
    %v1344 = vpop.permute.xlu0 %1343
    %vm1345 = vcmp.ge.s32.totalorder %v46, 2
    %v1346 = vmul.f32 %v1321, %v1330
    %v1347 = vmul.f32 %v1322, %v1332
    %v1348 = vmul.f32 %v1323, %v1334
    %v1349 = vmul.f32 %v1324, %v1336
    %v1350 = vmul.f32 %v1325, %v1338
    %v1351 = vmul.f32 %v1326, %v1340
    %v1352 = vmul.f32 %v1327, %v1342
    %v1353 = vmul.f32 %v1328, %v1344
    %v1354 = vsel %vm1345, %v1346, %v1321
    %v1355 = vsel %vm1345, %v1347, %v1322
    %v1356 = vsel %vm1345, %v1348, %v1323
    %v1357 = vsel %vm1345, %v1349, %v1324
    %v1358 = vsel %vm1345, %v1350, %v1325
    %v1359 = vsel %vm1345, %v1351, %v1326
    %v1360 = vsel %vm1345, %v1352, %v1327
    %v1361 = vsel %vm1345, %v1353, %v1328
    %1362 = vrot.lane.b32.xlu0 %v1354, 4
    %v1363 = vpop.permute.xlu0 %1362
    %1364 = vrot.lane.b32.xlu0 %v1355, 4
    %v1365 = vpop.permute.xlu0 %1364
    %1366 = vrot.lane.b32.xlu0 %v1356, 4
    %v1367 = vpop.permute.xlu0 %1366
    %1368 = vrot.lane.b32.xlu0 %v1357, 4
    %v1369 = vpop.permute.xlu0 %1368
    %1370 = vrot.lane.b32.xlu0 %v1358, 4
    %v1371 = vpop.permute.xlu0 %1370
    %1372 = vrot.lane.b32.xlu0 %v1359, 4
    %v1373 = vpop.permute.xlu0 %1372
    %1374 = vrot.lane.b32.xlu0 %v1360, 4
    %v1375 = vpop.permute.xlu0 %1374
    %1376 = vrot.lane.b32.xlu0 %v1361, 4
    %v1377 = vpop.permute.xlu0 %1376
    %vm1378 = vcmp.ge.s32.totalorder %v46, 4
    %v1379 = vmul.f32 %v1354, %v1363
    %v1380 = vmul.f32 %v1355, %v1365
    %v1381 = vmul.f32 %v1356, %v1367
    %v1382 = vmul.f32 %v1357, %v1369
    %v1383 = vmul.f32 %v1358, %v1371
    %v1384 = vmul.f32 %v1359, %v1373
    %v1385 = vmul.f32 %v1360, %v1375
    %v1386 = vmul.f32 %v1361, %v1377
    %v1387 = vsel %vm1378, %v1379, %v1354
    %v1388 = vsel %vm1378, %v1380, %v1355
    %v1389 = vsel %vm1378, %v1381, %v1356
    %v1390 = vsel %vm1378, %v1382, %v1357
    %v1391 = vsel %vm1378, %v1383, %v1358
    %v1392 = vsel %vm1378, %v1384, %v1359
    %v1393 = vsel %vm1378, %v1385, %v1360
    %v1394 = vsel %vm1378, %v1386, %v1361
    %v1395 = vand.u32 2147483647, %v25
    %vm1396 = vcmp.le.f32.partialorder %v1395, 0.7853982
    %vm1397 = vcmp.lt.s32.totalorder %v25, 0
    %v1398 = vand.u32 %v25, 2139095040
    %v1399 = vshrl.u32 %v1398, 23
    %v1400 = vsub.s32 %v1399, 127
    %v1401 = vand.u32 2147483647, %v25
    %v1402 = vand.u32 %v1401, 8388607
    %v1403 = vor.u32 %v1402, 8388608
    %v1404 = vsub.s32 0, %v1403
    %v1405 = vadd.s32 %v1400, 1
    %vm1406 = vcmp.gt.s32.totalorder %v1405, 0
    %v1407 = vsel %vm1406, %v1405, 0
    %v1408 = vshrl.u32 %v1407, 5
    %v1409 = vand.u32 %v1407, 31
    %v1410 = vsub.s32 32, %v1409
    %v1411 = vshrl.u32 683565275, %v1410
    %v1412 = vshll.u32 683565275, %v1409
    %v1413 = vshrl.u32 2475754826, %v1410
    %v1414 = vor.u32 %v1412, %v1413
    %v1415 = vshll.u32 2475754826, %v1409
    %v1416 = vshrl.u32 2131351028, %v1410
    %v1417 = vor.u32 %v1415, %v1416
    %v1418 = vshll.u32 2131351028, %v1409
    %v1419 = vshrl.u32 2102212464, %v1410
    %v1420 = vor.u32 %v1418, %v1419
    %v1421 = vshll.u32 2102212464, %v1409
    %v1422 = vshrl.u32 920167782, %v1410
    %v1423 = vor.u32 %v1421, %v1422
    %v1424 = vshll.u32 920167782, %v1409
    %v1425 = vshrl.u32 1326507024, %v1410
    %v1426 = vor.u32 %v1424, %v1425
    %vm1427 = vcmp.lt.s32.totalorder %v1408, 1
    %vm1428 = vcmp.lt.s32.totalorder %v1408, 2
    %vm1429 = vcmp.lt.s32.totalorder %v1408, 3
    %vm1430 = vcmp.lt.s32.totalorder %v1408, 4
    %v1431 = vsel %vm1427, %v1411, %v1414
    %v1432 = vsel %vm1430, %v1420, 2102212464
    %v1433 = vsel %vm1429, %v1417, %v1432
    %v1434 = vsel %vm1428, %v1431, %v1433
    %v1435 = vsel %vm1427, %v1414, %v1417
    %v1436 = vsel %vm1430, %v1423, 920167782
    %v1437 = vsel %vm1429, %v1420, %v1436
    %v1438 = vsel %vm1428, %v1435, %v1437
    %v1439 = vsel %vm1427, %v1417, %v1420
    %v1440 = vsel %vm1430, %v1426, 1326507024
    %v1441 = vsel %vm1429, %v1423, %v1440
    %v1442 = vsel %vm1428, %v1439, %v1441
    %v1443 = vshll.u32 %v1403, 8
    %v1444 = vand.u32 %v1443, 65535
    %v1445 = vshrl.u32 %v1443, 16
    %v1446 = vand.u32 %v1442, 65535
    %v1447 = vshrl.u32 %v1442, 16
    %v1448 = vmul.u32 %v1444, %v1446
    %v1449 = vmul.u32 %v1444, %v1447
    %v1450 = vmul.u32 %v1445, %v1446
    %v1451 = vmul.u32 %v1445, %v1447
    %v1452 = vshll.u32 %v1449, 16
    %v1453 = vshrl.u32 %v1449, 16
    %v1454 = vshll.u32 %v1450, 16
    %v1455 = vshrl.u32 %v1450, 16
    %vm1456 = vc.u32 %v1448, %v1452
    %v1457 = vsel %vm1456, 1, 0
    %v1458 = vadd.s32 %v1448, %v1452
    %v1459 = vadd.s32 %v1451, %v1457
    %vm1460 = vc.u32 %v1458, %v1454
    %v1461 = vsel %vm1460, 1, 0
    %v1462 = vadd.s32 %v1458, %v1454
    %v1463 = vadd.s32 %v1459, %v1461
    %v1464 = vadd.s32 %v1463, %v1453
    %v1465 = vadd.s32 %v1464, %v1455
    %v1466 = vand.u32 %v1443, 65535
    %v1467 = vshrl.u32 %v1443, 16
    %v1468 = vand.u32 %v1438, 65535
    %v1469 = vshrl.u32 %v1438, 16
    %v1470 = vmul.u32 %v1466, %v1468
    %v1471 = vmul.u32 %v1466, %v1469
    %v1472 = vmul.u32 %v1467, %v1468
    %v1473 = vmul.u32 %v1467, %v1469
    %v1474 = vshll.u32 %v1471, 16
    %v1475 = vshrl.u32 %v1471, 16
    %v1476 = vshll.u32 %v1472, 16
    %v1477 = vshrl.u32 %v1472, 16
    %vm1478 = vc.u32 %v1470, %v1474
    %v1479 = vsel %vm1478, 1, 0
    %v1480 = vadd.s32 %v1470, %v1474
    %v1481 = vadd.s32 %v1473, %v1479
    %vm1482 = vc.u32 %v1480, %v1476
    %v1483 = vsel %vm1482, 1, 0
    %v1484 = vadd.s32 %v1480, %v1476
    %v1485 = vadd.s32 %v1481, %v1483
    %v1486 = vadd.s32 %v1485, %v1475
    %v1487 = vadd.s32 %v1486, %v1477
    %v1488 = vmul.u32 %v1443, %v1434
    %v1489 = vadd.s32 %v1465, %v1484
    %vm1490 = vc.u32 %v1465, %v1484
    %v1491 = vadd.s32 %v1487, 1
    %v1492 = vsel %vm1490, %v1491, %v1487
    %v1493 = vadd.s32 %v1488, %v1492
    %v1494 = vadd.s32 %v1493, 536870912
    %v1495 = vshrl.u32 %v1494, 30
    %v1496 = vshll.u32 %v1495, 30
    %v1497 = vsub.s32 %v1493, %v1496
    %vm1498 = vcmp.lt.s32.totalorder %v1497, 0
    %v1499 = vsub.s32 0, %v1497
    %v1500 = vsel %vm1498, %v1499, %v1497
    %v1501 = vclz %v1500
    %v1502 = vsub.s32 %v1501, 2
    %vm1503 = vcmp.gt.s32.totalorder 0, %v1502
    %v1504 = vsel %vm1503, 0, %v1502
    %v1505 = vsub.s32 32, %v1504
    %v1506 = vshll.u32 %v1497, %v1504
    %v1507 = vshrl.u32 %v1489, %v1505
    %v1508 = vor.u32 %v1506, %v1507
    %v1509 = vsub.s32 4294967266, %v1504
    %v1510 = vadd.s32 %v1509, 127
    %v1511 = vshll.u32 %v1510, 23
    %v1512 = vor.u32 4788187, %v1511
    %v1513 = vand.u32 2147483647, %v1512
    %v1515 = vcvt.s32.f32 %v1508
    %v1516 = vmul.f32 %v1515, %v1513
    %v1517 = vxor.u32 %v1516, 2147483648
    %v1518 = vsel %vm1397, %v1517, %v1516
    %v1519 = vsub.s32 4, %v1495
    %v1520 = vsel %vm1397, %v1519, %v1495
    %v1521 = vsel %vm1396, %v25, %v1518
    %v1522 = vsel %vm1396, 0, %v1520
    %v1523 = vmul.f32 %v1521, %v1521
    %v1524 = vmul.f32 %v1523, -0.001358992
    %v1525 = vadd.f32 %v1524, 0.041655596
    %v1526 = vmul.f32 %v1523, %v1525
    %v1527 = vadd.f32 %v1526, -0.4999988
    %v1528 = vmul.f32 %v1523, %v1527
    %v1529 = vadd.f32 1.0, %v1528
    %v1530 = vmul.f32 %v1521, %v1521
    %v1531 = vmul.f32 %v1530, -0.00019511016
    %v1532 = vadd.f32 %v1531, 0.008332121
    %v1533 = vmul.f32 %v1530, %v1532
    %v1534 = vadd.f32 %v1533, -0.16666654
    %v1535 = vmul.f32 %v1530, %v1534
    %v1536 = vadd.f32 %v1535, 1.0
    %v1537 = vmul.f32 %v1536, %v1521
    %vm1538 = vweird.f32 %v25
    %v1539 = vand.u32 %v1522, 3
    %vm1540 = vcmp.lt.s32.totalorder %v1539, 2
    %vm1541 = vcmp.eq.s32.totalorder %v1539, 0
    %v1542 = vxor.u32 %v1537, 2147483648
    %v1543 = vsel %vm1541, %v1529, %v1542
    %vm1544 = vcmp.eq.s32.totalorder %v1539, 2
    %v1545 = vxor.u32 %v1529, 2147483648
    %v1546 = vsel %vm1544, %v1545, %v1537
    %v1547 = vsel %vm1540, %v1543, %v1546
    %v1548 = vsel %vm1538, nan, %v1547
    %v1549 = vand.u32 2147483647, %v26
    %vm1550 = vcmp.le.f32.partialorder %v1549, 0.7853982
    %vm1551 = vcmp.lt.s32.totalorder %v26, 0
    %v1552 = vand.u32 %v26, 2139095040
    %v1553 = vshrl.u32 %v1552, 23
    %v1554 = vsub.s32 %v1553, 127
    %v1555 = vand.u32 2147483647, %v26
    %v1556 = vand.u32 %v1555, 8388607
    %v1557 = vor.u32 %v1556, 8388608
    %v1558 = vsub.s32 0, %v1557
    %v1559 = vadd.s32 %v1554, 1
    %vm1560 = vcmp.gt.s32.totalorder %v1559, 0
    %v1561 = vsel %vm1560, %v1559, 0
    %v1562 = vshrl.u32 %v1561, 5
    %v1563 = vand.u32 %v1561, 31
    %v1564 = vsub.s32 32, %v1563
    %v1565 = vshrl.u32 683565275, %v1564
    %v1566 = vshll.u32 683565275, %v1563
    %v1567 = vshrl.u32 2475754826, %v1564
    %v1568 = vor.u32 %v1566, %v1567
    %v1569 = vshll.u32 2475754826, %v1563
    %v1570 = vshrl.u32 2131351028, %v1564
    %v1571 = vor.u32 %v1569, %v1570
    %v1572 = vshll.u32 2131351028, %v1563
    %v1573 = vshrl.u32 2102212464, %v1564
    %v1574 = vor.u32 %v1572, %v1573
    %v1575 = vshll.u32 2102212464, %v1563
    %v1576 = vshrl.u32 920167782, %v1564
    %v1577 = vor.u32 %v1575, %v1576
    %v1578 = vshll.u32 920167782, %v1563
    %v1579 = vshrl.u32 1326507024, %v1564
    %v1580 = vor.u32 %v1578, %v1579
    %vm1581 = vcmp.lt.s32.totalorder %v1562, 1
    %vm1582 = vcmp.lt.s32.totalorder %v1562, 2
    %vm1583 = vcmp.lt.s32.totalorder %v1562, 3
    %vm1584 = vcmp.lt.s32.totalorder %v1562, 4
    %v1585 = vsel %vm1581, %v1565, %v1568
    %v1586 = vsel %vm1584, %v1574, 2102212464
    %v1587 = vsel %vm1583, %v1571, %v1586
    %v1588 = vsel %vm1582, %v1585, %v1587
    %v1589 = vsel %vm1581, %v1568, %v1571
    %v1590 = vsel %vm1584, %v1577, 920167782
    %v1591 = vsel %vm1583, %v1574, %v1590
    %v1592 = vsel %vm1582, %v1589, %v1591
    %v1593 = vsel %vm1581, %v1571, %v1574
    %v1594 = vsel %vm1584, %v1580, 1326507024
    %v1595 = vsel %vm1583, %v1577, %v1594
    %v1596 = vsel %vm1582, %v1593, %v1595
    %v1597 = vshll.u32 %v1557, 8
    %v1598 = vand.u32 %v1597, 65535
    %v1599 = vshrl.u32 %v1597, 16
    %v1600 = vand.u32 %v1596, 65535
    %v1601 = vshrl.u32 %v1596, 16
    %v1602 = vmul.u32 %v1598, %v1600
    %v1603 = vmul.u32 %v1598, %v1601
    %v1604 = vmul.u32 %v1599, %v1600
    %v1605 = vmul.u32 %v1599, %v1601
    %v1606 = vshll.u32 %v1603, 16
    %v1607 = vshrl.u32 %v1603, 16
    %v1608 = vshll.u32 %v1604, 16
    %v1609 = vshrl.u32 %v1604, 16
    %vm1610 = vc.u32 %v1602, %v1606
    %v1611 = vsel %vm1610, 1, 0
    %v1612 = vadd.s32 %v1602, %v1606
    %v1613 = vadd.s32 %v1605, %v1611
    %vm1614 = vc.u32 %v1612, %v1608
    %v1615 = vsel %vm1614, 1, 0
    %v1616 = vadd.s32 %v1612, %v1608
    %v1617 = vadd.s32 %v1613, %v1615
    %v1618 = vadd.s32 %v1617, %v1607
    %v1619 = vadd.s32 %v1618, %v1609
    %v1620 = vand.u32 %v1597, 65535
    %v1621 = vshrl.u32 %v1597, 16
    %v1622 = vand.u32 %v1592, 65535
    %v1623 = vshrl.u32 %v1592, 16
    %v1624 = vmul.u32 %v1620, %v1622
    %v1625 = vmul.u32 %v1620, %v1623
    %v1626 = vmul.u32 %v1621, %v1622
    %v1627 = vmul.u32 %v1621, %v1623
    %v1628 = vshll.u32 %v1625, 16
    %v1629 = vshrl.u32 %v1625, 16
    %v1630 = vshll.u32 %v1626, 16
    %v1631 = vshrl.u32 %v1626, 16
    %vm1632 = vc.u32 %v1624, %v1628
    %v1633 = vsel %vm1632, 1, 0
    %v1634 = vadd.s32 %v1624, %v1628
    %v1635 = vadd.s32 %v1627, %v1633
    %vm1636 = vc.u32 %v1634, %v1630
    %v1637 = vsel %vm1636, 1, 0
    %v1638 = vadd.s32 %v1634, %v1630
    %v1639 = vadd.s32 %v1635, %v1637
    %v1640 = vadd.s32 %v1639, %v1629
    %v1641 = vadd.s32 %v1640, %v1631
    %v1642 = vmul.u32 %v1597, %v1588
    %v1643 = vadd.s32 %v1619, %v1638
    %vm1644 = vc.u32 %v1619, %v1638
    %v1645 = vadd.s32 %v1641, 1
    %v1646 = vsel %vm1644, %v1645, %v1641
    %v1647 = vadd.s32 %v1642, %v1646
    %v1648 = vadd.s32 %v1647, 536870912
    %v1649 = vshrl.u32 %v1648, 30
    %v1650 = vshll.u32 %v1649, 30
    %v1651 = vsub.s32 %v1647, %v1650
    %vm1652 = vcmp.lt.s32.totalorder %v1651, 0
    %v1653 = vsub.s32 0, %v1651
    %v1654 = vsel %vm1652, %v1653, %v1651
    %v1655 = vclz %v1654
    %v1656 = vsub.s32 %v1655, 2
    %vm1657 = vcmp.gt.s32.totalorder 0, %v1656
    %v1658 = vsel %vm1657, 0, %v1656
    %v1659 = vsub.s32 32, %v1658
    %v1660 = vshll.u32 %v1651, %v1658
    %v1661 = vshrl.u32 %v1643, %v1659
    %v1662 = vor.u32 %v1660, %v1661
    %v1663 = vsub.s32 4294967266, %v1658
    %v1664 = vadd.s32 %v1663, 127
    %v1665 = vshll.u32 %v1664, 23
    %v1666 = vor.u32 4788187, %v1665
    %v1667 = vand.u32 2147483647, %v1666
    %v1669 = vcvt.s32.f32 %v1662
    %v1670 = vmul.f32 %v1669, %v1667
    %v1671 = vxor.u32 %v1670, 2147483648
    %v1672 = vsel %vm1551, %v1671, %v1670
    %v1673 = vsub.s32 4, %v1649
    %v1674 = vsel %vm1551, %v1673, %v1649
    %v1675 = vsel %vm1550, %v26, %v1672
    %v1676 = vsel %vm1550, 0, %v1674
    %v1677 = vmul.f32 %v1675, %v1675
    %v1678 = vmul.f32 %v1677, -0.001358992
    %v1679 = vadd.f32 %v1678, 0.041655596
    %v1680 = vmul.f32 %v1677, %v1679
    %v1681 = vadd.f32 %v1680, -0.4999988
    %v1682 = vmul.f32 %v1677, %v1681
    %v1683 = vadd.f32 1.0, %v1682
    %v1684 = vmul.f32 %v1675, %v1675
    %v1685 = vmul.f32 %v1684, -0.00019511016
    %v1686 = vadd.f32 %v1685, 0.008332121
    %v1687 = vmul.f32 %v1684, %v1686
    %v1688 = vadd.f32 %v1687, -0.16666654
    %v1689 = vmul.f32 %v1684, %v1688
    %v1690 = vadd.f32 %v1689, 1.0
    %v1691 = vmul.f32 %v1690, %v1675
    %vm1692 = vweird.f32 %v26
    %v1693 = vand.u32 %v1676, 3
    %vm1694 = vcmp.lt.s32.totalorder %v1693, 2
    %vm1695 = vcmp.eq.s32.totalorder %v1693, 0
    %v1696 = vxor.u32 %v1691, 2147483648
    %v1697 = vsel %vm1695, %v1683, %v1696
    %vm1698 = vcmp.eq.s32.totalorder %v1693, 2
    %v1699 = vxor.u32 %v1683, 2147483648
    %v1700 = vsel %vm1698, %v1699, %v1691
    %v1701 = vsel %vm1694, %v1697, %v1700
    %v1702 = vsel %vm1692, nan, %v1701
    %v1703 = vand.u32 2147483647, %v27
    %vm1704 = vcmp.le.f32.partialorder %v1703, 0.7853982
    %vm1705 = vcmp.lt.s32.totalorder %v27, 0
    %v1706 = vand.u32 %v27, 2139095040
    %v1707 = vshrl.u32 %v1706, 23
    %v1708 = vsub.s32 %v1707, 127
    %v1709 = vand.u32 2147483647, %v27
    %v1710 = vand.u32 %v1709, 8388607
    %v1711 = vor.u32 %v1710, 8388608
    %v1712 = vsub.s32 0, %v1711
    %v1713 = vadd.s32 %v1708, 1
    %vm1714 = vcmp.gt.s32.totalorder %v1713, 0
    %v1715 = vsel %vm1714, %v1713, 0
    %v1716 = vshrl.u32 %v1715, 5
    %v1717 = vand.u32 %v1715, 31
    %v1718 = vsub.s32 32, %v1717
    %v1719 = vshrl.u32 683565275, %v1718
    %v1720 = vshll.u32 683565275, %v1717
    %v1721 = vshrl.u32 2475754826, %v1718
    %v1722 = vor.u32 %v1720, %v1721
    %v1723 = vshll.u32 2475754826, %v1717
    %v1724 = vshrl.u32 2131351028, %v1718
    %v1725 = vor.u32 %v1723, %v1724
    %v1726 = vshll.u32 2131351028, %v1717
    %v1727 = vshrl.u32 2102212464, %v1718
    %v1728 = vor.u32 %v1726, %v1727
    %v1729 = vshll.u32 2102212464, %v1717
    %v1730 = vshrl.u32 920167782, %v1718
    %v1731 = vor.u32 %v1729, %v1730
    %v1732 = vshll.u32 920167782, %v1717
    %v1733 = vshrl.u32 1326507024, %v1718
    %v1734 = vor.u32 %v1732, %v1733
    %vm1735 = vcmp.lt.s32.totalorder %v1716, 1
    %vm1736 = vcmp.lt.s32.totalorder %v1716, 2
    %vm1737 = vcmp.lt.s32.totalorder %v1716, 3
    %vm1738 = vcmp.lt.s32.totalorder %v1716, 4
    %v1739 = vsel %vm1735, %v1719, %v1722
    %v1740 = vsel %vm1738, %v1728, 2102212464
    %v1741 = vsel %vm1737, %v1725, %v1740
    %v1742 = vsel %vm1736, %v1739, %v1741
    %v1743 = vsel %vm1735, %v1722, %v1725
    %v1744 = vsel %vm1738, %v1731, 920167782
    %v1745 = vsel %vm1737, %v1728, %v1744
    %v1746 = vsel %vm1736, %v1743, %v1745
    %v1747 = vsel %vm1735, %v1725, %v1728
    %v1748 = vsel %vm1738, %v1734, 1326507024
    %v1749 = vsel %vm1737, %v1731, %v1748
    %v1750 = vsel %vm1736, %v1747, %v1749
    %v1751 = vshll.u32 %v1711, 8
    %v1752 = vand.u32 %v1751, 65535
    %v1753 = vshrl.u32 %v1751, 16
    %v1754 = vand.u32 %v1750, 65535
    %v1755 = vshrl.u32 %v1750, 16
    %v1756 = vmul.u32 %v1752, %v1754
    %v1757 = vmul.u32 %v1752, %v1755
    %v1758 = vmul.u32 %v1753, %v1754
    %v1759 = vmul.u32 %v1753, %v1755
    %v1760 = vshll.u32 %v1757, 16
    %v1761 = vshrl.u32 %v1757, 16
    %v1762 = vshll.u32 %v1758, 16
    %v1763 = vshrl.u32 %v1758, 16
    %vm1764 = vc.u32 %v1756, %v1760
    %v1765 = vsel %vm1764, 1, 0
    %v1766 = vadd.s32 %v1756, %v1760
    %v1767 = vadd.s32 %v1759, %v1765
    %vm1768 = vc.u32 %v1766, %v1762
    %v1769 = vsel %vm1768, 1, 0
    %v1770 = vadd.s32 %v1766, %v1762
    %v1771 = vadd.s32 %v1767, %v1769
    %v1772 = vadd.s32 %v1771, %v1761
    %v1773 = vadd.s32 %v1772, %v1763
    %v1774 = vand.u32 %v1751, 65535
    %v1775 = vshrl.u32 %v1751, 16
    %v1776 = vand.u32 %v1746, 65535
    %v1777 = vshrl.u32 %v1746, 16
    %v1778 = vmul.u32 %v1774, %v1776
    %v1779 = vmul.u32 %v1774, %v1777
    %v1780 = vmul.u32 %v1775, %v1776
    %v1781 = vmul.u32 %v1775, %v1777
    %v1782 = vshll.u32 %v1779, 16
    %v1783 = vshrl.u32 %v1779, 16
    %v1784 = vshll.u32 %v1780, 16
    %v1785 = vshrl.u32 %v1780, 16
    %vm1786 = vc.u32 %v1778, %v1782
    %v1787 = vsel %vm1786, 1, 0
    %v1788 = vadd.s32 %v1778, %v1782
    %v1789 = vadd.s32 %v1781, %v1787
    %vm1790 = vc.u32 %v1788, %v1784
    %v1791 = vsel %vm1790, 1, 0
    %v1792 = vadd.s32 %v1788, %v1784
    %v1793 = vadd.s32 %v1789, %v1791
    %v1794 = vadd.s32 %v1793, %v1783
    %v1795 = vadd.s32 %v1794, %v1785
    %v1796 = vmul.u32 %v1751, %v1742
    %v1797 = vadd.s32 %v1773, %v1792
    %vm1798 = vc.u32 %v1773, %v1792
    %v1799 = vadd.s32 %v1795, 1
    %v1800 = vsel %vm1798, %v1799, %v1795
    %v1801 = vadd.s32 %v1796, %v1800
    %v1802 = vadd.s32 %v1801, 536870912
    %v1803 = vshrl.u32 %v1802, 30
    %v1804 = vshll.u32 %v1803, 30
    %v1805 = vsub.s32 %v1801, %v1804
    %vm1806 = vcmp.lt.s32.totalorder %v1805, 0
    %v1807 = vsub.s32 0, %v1805
    %v1808 = vsel %vm1806, %v1807, %v1805
    %v1809 = vclz %v1808
    %v1810 = vsub.s32 %v1809, 2
    %vm1811 = vcmp.gt.s32.totalorder 0, %v1810
    %v1812 = vsel %vm1811, 0, %v1810
    %v1813 = vsub.s32 32, %v1812
    %v1814 = vshll.u32 %v1805, %v1812
    %v1815 = vshrl.u32 %v1797, %v1813
    %v1816 = vor.u32 %v1814, %v1815
    %v1817 = vsub.s32 4294967266, %v1812
    %v1818 = vadd.s32 %v1817, 127
    %v1819 = vshll.u32 %v1818, 23
    %v1820 = vor.u32 4788187, %v1819
    %v1821 = vand.u32 2147483647, %v1820
    %v1823 = vcvt.s32.f32 %v1816
    %v1824 = vmul.f32 %v1823, %v1821
    %v1825 = vxor.u32 %v1824, 2147483648
    %v1826 = vsel %vm1705, %v1825, %v1824
    %v1827 = vsub.s32 4, %v1803
    %v1828 = vsel %vm1705, %v1827, %v1803
    %v1829 = vsel %vm1704, %v27, %v1826
    %v1830 = vsel %vm1704, 0, %v1828
    %v1831 = vmul.f32 %v1829, %v1829
    %v1832 = vmul.f32 %v1831, -0.001358992
    %v1833 = vadd.f32 %v1832, 0.041655596
    %v1834 = vmul.f32 %v1831, %v1833
    %v1835 = vadd.f32 %v1834, -0.4999988
    %v1836 = vmul.f32 %v1831, %v1835
    %v1837 = vadd.f32 1.0, %v1836
    %v1838 = vmul.f32 %v1829, %v1829
    %v1839 = vmul.f32 %v1838, -0.00019511016
    %v1840 = vadd.f32 %v1839, 0.008332121
    %v1841 = vmul.f32 %v1838, %v1840
    %v1842 = vadd.f32 %v1841, -0.16666654
    %v1843 = vmul.f32 %v1838, %v1842
    %v1844 = vadd.f32 %v1843, 1.0
    %v1845 = vmul.f32 %v1844, %v1829
    %vm1846 = vweird.f32 %v27
    %v1847 = vand.u32 %v1830, 3
    %vm1848 = vcmp.lt.s32.totalorder %v1847, 2
    %vm1849 = vcmp.eq.s32.totalorder %v1847, 0
    %v1850 = vxor.u32 %v1845, 2147483648
    %v1851 = vsel %vm1849, %v1837, %v1850
    %vm1852 = vcmp.eq.s32.totalorder %v1847, 2
    %v1853 = vxor.u32 %v1837, 2147483648
    %v1854 = vsel %vm1852, %v1853, %v1845
    %v1855 = vsel %vm1848, %v1851, %v1854
    %v1856 = vsel %vm1846, nan, %v1855
    %v1857 = vand.u32 2147483647, %v28
    %vm1858 = vcmp.le.f32.partialorder %v1857, 0.7853982
    %vm1859 = vcmp.lt.s32.totalorder %v28, 0
    %v1860 = vand.u32 %v28, 2139095040
    %v1861 = vshrl.u32 %v1860, 23
    %v1862 = vsub.s32 %v1861, 127
    %v1863 = vand.u32 2147483647, %v28
    %v1864 = vand.u32 %v1863, 8388607
    %v1865 = vor.u32 %v1864, 8388608
    %v1866 = vsub.s32 0, %v1865
    %v1867 = vadd.s32 %v1862, 1
    %vm1868 = vcmp.gt.s32.totalorder %v1867, 0
    %v1869 = vsel %vm1868, %v1867, 0
    %v1870 = vshrl.u32 %v1869, 5
    %v1871 = vand.u32 %v1869, 31
    %v1872 = vsub.s32 32, %v1871
    %v1873 = vshrl.u32 683565275, %v1872
    %v1874 = vshll.u32 683565275, %v1871
    %v1875 = vshrl.u32 2475754826, %v1872
    %v1876 = vor.u32 %v1874, %v1875
    %v1877 = vshll.u32 2475754826, %v1871
    %v1878 = vshrl.u32 2131351028, %v1872
    %v1879 = vor.u32 %v1877, %v1878
    %v1880 = vshll.u32 2131351028, %v1871
    %v1881 = vshrl.u32 2102212464, %v1872
    %v1882 = vor.u32 %v1880, %v1881
    %v1883 = vshll.u32 2102212464, %v1871
    %v1884 = vshrl.u32 920167782, %v1872
    %v1885 = vor.u32 %v1883, %v1884
    %v1886 = vshll.u32 920167782, %v1871
    %v1887 = vshrl.u32 1326507024, %v1872
    %v1888 = vor.u32 %v1886, %v1887
    %vm1889 = vcmp.lt.s32.totalorder %v1870, 1
    %vm1890 = vcmp.lt.s32.totalorder %v1870, 2
    %vm1891 = vcmp.lt.s32.totalorder %v1870, 3
    %vm1892 = vcmp.lt.s32.totalorder %v1870, 4
    %v1893 = vsel %vm1889, %v1873, %v1876
    %v1894 = vsel %vm1892, %v1882, 2102212464
    %v1895 = vsel %vm1891, %v1879, %v1894
    %v1896 = vsel %vm1890, %v1893, %v1895
    %v1897 = vsel %vm1889, %v1876, %v1879
    %v1898 = vsel %vm1892, %v1885, 920167782
    %v1899 = vsel %vm1891, %v1882, %v1898
    %v1900 = vsel %vm1890, %v1897, %v1899
    %v1901 = vsel %vm1889, %v1879, %v1882
    %v1902 = vsel %vm1892, %v1888, 1326507024
    %v1903 = vsel %vm1891, %v1885, %v1902
    %v1904 = vsel %vm1890, %v1901, %v1903
    %v1905 = vshll.u32 %v1865, 8
    %v1906 = vand.u32 %v1905, 65535
    %v1907 = vshrl.u32 %v1905, 16
    %v1908 = vand.u32 %v1904, 65535
    %v1909 = vshrl.u32 %v1904, 16
    %v1910 = vmul.u32 %v1906, %v1908
    %v1911 = vmul.u32 %v1906, %v1909
    %v1912 = vmul.u32 %v1907, %v1908
    %v1913 = vmul.u32 %v1907, %v1909
    %v1914 = vshll.u32 %v1911, 16
    %v1915 = vshrl.u32 %v1911, 16
    %v1916 = vshll.u32 %v1912, 16
    %v1917 = vshrl.u32 %v1912, 16
    %vm1918 = vc.u32 %v1910, %v1914
    %v1919 = vsel %vm1918, 1, 0
    %v1920 = vadd.s32 %v1910, %v1914
    %v1921 = vadd.s32 %v1913, %v1919
    %vm1922 = vc.u32 %v1920, %v1916
    %v1923 = vsel %vm1922, 1, 0
    %v1924 = vadd.s32 %v1920, %v1916
    %v1925 = vadd.s32 %v1921, %v1923
    %v1926 = vadd.s32 %v1925, %v1915
    %v1927 = vadd.s32 %v1926, %v1917
    %v1928 = vand.u32 %v1905, 65535
    %v1929 = vshrl.u32 %v1905, 16
    %v1930 = vand.u32 %v1900, 65535
    %v1931 = vshrl.u32 %v1900, 16
    %v1932 = vmul.u32 %v1928, %v1930
    %v1933 = vmul.u32 %v1928, %v1931
    %v1934 = vmul.u32 %v1929, %v1930
    %v1935 = vmul.u32 %v1929, %v1931
    %v1936 = vshll.u32 %v1933, 16
    %v1937 = vshrl.u32 %v1933, 16
    %v1938 = vshll.u32 %v1934, 16
    %v1939 = vshrl.u32 %v1934, 16
    %vm1940 = vc.u32 %v1932, %v1936
    %v1941 = vsel %vm1940, 1, 0
    %v1942 = vadd.s32 %v1932, %v1936
    %v1943 = vadd.s32 %v1935, %v1941
    %vm1944 = vc.u32 %v1942, %v1938
    %v1945 = vsel %vm1944, 1, 0
    %v1946 = vadd.s32 %v1942, %v1938
    %v1947 = vadd.s32 %v1943, %v1945
    %v1948 = vadd.s32 %v1947, %v1937
    %v1949 = vadd.s32 %v1948, %v1939
    %v1950 = vmul.u32 %v1905, %v1896
    %v1951 = vadd.s32 %v1927, %v1946
    %vm1952 = vc.u32 %v1927, %v1946
    %v1953 = vadd.s32 %v1949, 1
    %v1954 = vsel %vm1952, %v1953, %v1949
    %v1955 = vadd.s32 %v1950, %v1954
    %v1956 = vadd.s32 %v1955, 536870912
    %v1957 = vshrl.u32 %v1956, 30
    %v1958 = vshll.u32 %v1957, 30
    %v1959 = vsub.s32 %v1955, %v1958
    %vm1960 = vcmp.lt.s32.totalorder %v1959, 0
    %v1961 = vsub.s32 0, %v1959
    %v1962 = vsel %vm1960, %v1961, %v1959
    %v1963 = vclz %v1962
    %v1964 = vsub.s32 %v1963, 2
    %vm1965 = vcmp.gt.s32.totalorder 0, %v1964
    %v1966 = vsel %vm1965, 0, %v1964
    %v1967 = vsub.s32 32, %v1966
    %v1968 = vshll.u32 %v1959, %v1966
    %v1969 = vshrl.u32 %v1951, %v1967
    %v1970 = vor.u32 %v1968, %v1969
    %v1971 = vsub.s32 4294967266, %v1966
    %v1972 = vadd.s32 %v1971, 127
    %v1973 = vshll.u32 %v1972, 23
    %v1974 = vor.u32 4788187, %v1973
    %v1975 = vand.u32 2147483647, %v1974
    %v1977 = vcvt.s32.f32 %v1970
    %v1978 = vmul.f32 %v1977, %v1975
    %v1979 = vxor.u32 %v1978, 2147483648
    %v1980 = vsel %vm1859, %v1979, %v1978
    %v1981 = vsub.s32 4, %v1957
    %v1982 = vsel %vm1859, %v1981, %v1957
    %v1983 = vsel %vm1858, %v28, %v1980
    %v1984 = vsel %vm1858, 0, %v1982
    %v1985 = vmul.f32 %v1983, %v1983
    %v1986 = vmul.f32 %v1985, -0.001358992
    %v1987 = vadd.f32 %v1986, 0.041655596
    %v1988 = vmul.f32 %v1985, %v1987
    %v1989 = vadd.f32 %v1988, -0.4999988
    %v1990 = vmul.f32 %v1985, %v1989
    %v1991 = vadd.f32 1.0, %v1990
    %v1992 = vmul.f32 %v1983, %v1983
    %v1993 = vmul.f32 %v1992, -0.00019511016
    %v1994 = vadd.f32 %v1993, 0.008332121
    %v1995 = vmul.f32 %v1992, %v1994
    %v1996 = vadd.f32 %v1995, -0.16666654
    %v1997 = vmul.f32 %v1992, %v1996
    %v1998 = vadd.f32 %v1997, 1.0
    %v1999 = vmul.f32 %v1998, %v1983
    %vm2000 = vweird.f32 %v28
    %v2001 = vand.u32 %v1984, 3
    %vm2002 = vcmp.lt.s32.totalorder %v2001, 2
    %vm2003 = vcmp.eq.s32.totalorder %v2001, 0
    %v2004 = vxor.u32 %v1999, 2147483648
    %v2005 = vsel %vm2003, %v1991, %v2004
    %vm2006 = vcmp.eq.s32.totalorder %v2001, 2
    %v2007 = vxor.u32 %v1991, 2147483648
    %v2008 = vsel %vm2006, %v2007, %v1999
    %v2009 = vsel %vm2002, %v2005, %v2008
    %v2010 = vsel %vm2000, nan, %v2009
    %v2011 = vand.u32 2147483647, %v29
    %vm2012 = vcmp.le.f32.partialorder %v2011, 0.7853982
    %vm2013 = vcmp.lt.s32.totalorder %v29, 0
    %v2014 = vand.u32 %v29, 2139095040
    %v2015 = vshrl.u32 %v2014, 23
    %v2016 = vsub.s32 %v2015, 127
    %v2017 = vand.u32 2147483647, %v29
    %v2018 = vand.u32 %v2017, 8388607
    %v2019 = vor.u32 %v2018, 8388608
    %v2020 = vsub.s32 0, %v2019
    %v2021 = vadd.s32 %v2016, 1
    %vm2022 = vcmp.gt.s32.totalorder %v2021, 0
    %v2023 = vsel %vm2022, %v2021, 0
    %v2024 = vshrl.u32 %v2023, 5
    %v2025 = vand.u32 %v2023, 31
    %v2026 = vsub.s32 32, %v2025
    %v2027 = vshrl.u32 683565275, %v2026
    %v2028 = vshll.u32 683565275, %v2025
    %v2029 = vshrl.u32 2475754826, %v2026
    %v2030 = vor.u32 %v2028, %v2029
    %v2031 = vshll.u32 2475754826, %v2025
    %v2032 = vshrl.u32 2131351028, %v2026
    %v2033 = vor.u32 %v2031, %v2032
    %v2034 = vshll.u32 2131351028, %v2025
    %v2035 = vshrl.u32 2102212464, %v2026
    %v2036 = vor.u32 %v2034, %v2035
    %v2037 = vshll.u32 2102212464, %v2025
    %v2038 = vshrl.u32 920167782, %v2026
    %v2039 = vor.u32 %v2037, %v2038
    %v2040 = vshll.u32 920167782, %v2025
    %v2041 = vshrl.u32 1326507024, %v2026
    %v2042 = vor.u32 %v2040, %v2041
    %vm2043 = vcmp.lt.s32.totalorder %v2024, 1
    %vm2044 = vcmp.lt.s32.totalorder %v2024, 2
    %vm2045 = vcmp.lt.s32.totalorder %v2024, 3
    %vm2046 = vcmp.lt.s32.totalorder %v2024, 4
    %v2047 = vsel %vm2043, %v2027, %v2030
    %v2048 = vsel %vm2046, %v2036, 2102212464
    %v2049 = vsel %vm2045, %v2033, %v2048
    %v2050 = vsel %vm2044, %v2047, %v2049
    %v2051 = vsel %vm2043, %v2030, %v2033
    %v2052 = vsel %vm2046, %v2039, 920167782
    %v2053 = vsel %vm2045, %v2036, %v2052
    %v2054 = vsel %vm2044, %v2051, %v2053
    %v2055 = vsel %vm2043, %v2033, %v2036
    %v2056 = vsel %vm2046, %v2042, 1326507024
    %v2057 = vsel %vm2045, %v2039, %v2056
    %v2058 = vsel %vm2044, %v2055, %v2057
    %v2059 = vshll.u32 %v2019, 8
    %v2060 = vand.u32 %v2059, 65535
    %v2061 = vshrl.u32 %v2059, 16
    %v2062 = vand.u32 %v2058, 65535
    %v2063 = vshrl.u32 %v2058, 16
    %v2064 = vmul.u32 %v2060, %v2062
    %v2065 = vmul.u32 %v2060, %v2063
    %v2066 = vmul.u32 %v2061, %v2062
    %v2067 = vmul.u32 %v2061, %v2063
    %v2068 = vshll.u32 %v2065, 16
    %v2069 = vshrl.u32 %v2065, 16
    %v2070 = vshll.u32 %v2066, 16
    %v2071 = vshrl.u32 %v2066, 16
    %vm2072 = vc.u32 %v2064, %v2068
    %v2073 = vsel %vm2072, 1, 0
    %v2074 = vadd.s32 %v2064, %v2068
    %v2075 = vadd.s32 %v2067, %v2073
    %vm2076 = vc.u32 %v2074, %v2070
    %v2077 = vsel %vm2076, 1, 0
    %v2078 = vadd.s32 %v2074, %v2070
    %v2079 = vadd.s32 %v2075, %v2077
    %v2080 = vadd.s32 %v2079, %v2069
    %v2081 = vadd.s32 %v2080, %v2071
    %v2082 = vand.u32 %v2059, 65535
    %v2083 = vshrl.u32 %v2059, 16
    %v2084 = vand.u32 %v2054, 65535
    %v2085 = vshrl.u32 %v2054, 16
    %v2086 = vmul.u32 %v2082, %v2084
    %v2087 = vmul.u32 %v2082, %v2085
    %v2088 = vmul.u32 %v2083, %v2084
    %v2089 = vmul.u32 %v2083, %v2085
    %v2090 = vshll.u32 %v2087, 16
    %v2091 = vshrl.u32 %v2087, 16
    %v2092 = vshll.u32 %v2088, 16
    %v2093 = vshrl.u32 %v2088, 16
    %vm2094 = vc.u32 %v2086, %v2090
    %v2095 = vsel %vm2094, 1, 0
    %v2096 = vadd.s32 %v2086, %v2090
    %v2097 = vadd.s32 %v2089, %v2095
    %vm2098 = vc.u32 %v2096, %v2092
    %v2099 = vsel %vm2098, 1, 0
    %v2100 = vadd.s32 %v2096, %v2092
    %v2101 = vadd.s32 %v2097, %v2099
    %v2102 = vadd.s32 %v2101, %v2091
    %v2103 = vadd.s32 %v2102, %v2093
    %v2104 = vmul.u32 %v2059, %v2050
    %v2105 = vadd.s32 %v2081, %v2100
    %vm2106 = vc.u32 %v2081, %v2100
    %v2107 = vadd.s32 %v2103, 1
    %v2108 = vsel %vm2106, %v2107, %v2103
    %v2109 = vadd.s32 %v2104, %v2108
    %v2110 = vadd.s32 %v2109, 536870912
    %v2111 = vshrl.u32 %v2110, 30
    %v2112 = vshll.u32 %v2111, 30
    %v2113 = vsub.s32 %v2109, %v2112
    %vm2114 = vcmp.lt.s32.totalorder %v2113, 0
    %v2115 = vsub.s32 0, %v2113
    %v2116 = vsel %vm2114, %v2115, %v2113
    %v2117 = vclz %v2116
    %v2118 = vsub.s32 %v2117, 2
    %vm2119 = vcmp.gt.s32.totalorder 0, %v2118
    %v2120 = vsel %vm2119, 0, %v2118
    %v2121 = vsub.s32 32, %v2120
    %v2122 = vshll.u32 %v2113, %v2120
    %v2123 = vshrl.u32 %v2105, %v2121
    %v2124 = vor.u32 %v2122, %v2123
    %v2125 = vsub.s32 4294967266, %v2120
    %v2126 = vadd.s32 %v2125, 127
    %v2127 = vshll.u32 %v2126, 23
    %v2128 = vor.u32 4788187, %v2127
    %v2129 = vand.u32 2147483647, %v2128
    %v2131 = vcvt.s32.f32 %v2124
    %v2132 = vmul.f32 %v2131, %v2129
    %v2133 = vxor.u32 %v2132, 2147483648
    %v2134 = vsel %vm2013, %v2133, %v2132
    %v2135 = vsub.s32 4, %v2111
    %v2136 = vsel %vm2013, %v2135, %v2111
    %v2137 = vsel %vm2012, %v29, %v2134
    %v2138 = vsel %vm2012, 0, %v2136
    %v2139 = vmul.f32 %v2137, %v2137
    %v2140 = vmul.f32 %v2139, -0.001358992
    %v2141 = vadd.f32 %v2140, 0.041655596
    %v2142 = vmul.f32 %v2139, %v2141
    %v2143 = vadd.f32 %v2142, -0.4999988
    %v2144 = vmul.f32 %v2139, %v2143
    %v2145 = vadd.f32 1.0, %v2144
    %v2146 = vmul.f32 %v2137, %v2137
    %v2147 = vmul.f32 %v2146, -0.00019511016
    %v2148 = vadd.f32 %v2147, 0.008332121
    %v2149 = vmul.f32 %v2146, %v2148
    %v2150 = vadd.f32 %v2149, -0.16666654
    %v2151 = vmul.f32 %v2146, %v2150
    %v2152 = vadd.f32 %v2151, 1.0
    %v2153 = vmul.f32 %v2152, %v2137
    %vm2154 = vweird.f32 %v29
    %v2155 = vand.u32 %v2138, 3
    %vm2156 = vcmp.lt.s32.totalorder %v2155, 2
    %vm2157 = vcmp.eq.s32.totalorder %v2155, 0
    %v2158 = vxor.u32 %v2153, 2147483648
    %v2159 = vsel %vm2157, %v2145, %v2158
    %vm2160 = vcmp.eq.s32.totalorder %v2155, 2
    %v2161 = vxor.u32 %v2145, 2147483648
    %v2162 = vsel %vm2160, %v2161, %v2153
    %v2163 = vsel %vm2156, %v2159, %v2162
    %v2164 = vsel %vm2154, nan, %v2163
    %v2165 = vand.u32 2147483647, %v30
    %vm2166 = vcmp.le.f32.partialorder %v2165, 0.7853982
    %vm2167 = vcmp.lt.s32.totalorder %v30, 0
    %v2168 = vand.u32 %v30, 2139095040
    %v2169 = vshrl.u32 %v2168, 23
    %v2170 = vsub.s32 %v2169, 127
    %v2171 = vand.u32 2147483647, %v30
    %v2172 = vand.u32 %v2171, 8388607
    %v2173 = vor.u32 %v2172, 8388608
    %v2174 = vsub.s32 0, %v2173
    %v2175 = vadd.s32 %v2170, 1
    %vm2176 = vcmp.gt.s32.totalorder %v2175, 0
    %v2177 = vsel %vm2176, %v2175, 0
    %v2178 = vshrl.u32 %v2177, 5
    %v2179 = vand.u32 %v2177, 31
    %v2180 = vsub.s32 32, %v2179
    %v2181 = vshrl.u32 683565275, %v2180
    %v2182 = vshll.u32 683565275, %v2179
    %v2183 = vshrl.u32 2475754826, %v2180
    %v2184 = vor.u32 %v2182, %v2183
    %v2185 = vshll.u32 2475754826, %v2179
    %v2186 = vshrl.u32 2131351028, %v2180
    %v2187 = vor.u32 %v2185, %v2186
    %v2188 = vshll.u32 2131351028, %v2179
    %v2189 = vshrl.u32 2102212464, %v2180
    %v2190 = vor.u32 %v2188, %v2189
    %v2191 = vshll.u32 2102212464, %v2179
    %v2192 = vshrl.u32 920167782, %v2180
    %v2193 = vor.u32 %v2191, %v2192
    %v2194 = vshll.u32 920167782, %v2179
    %v2195 = vshrl.u32 1326507024, %v2180
    %v2196 = vor.u32 %v2194, %v2195
    %vm2197 = vcmp.lt.s32.totalorder %v2178, 1
    %vm2198 = vcmp.lt.s32.totalorder %v2178, 2
    %vm2199 = vcmp.lt.s32.totalorder %v2178, 3
    %vm2200 = vcmp.lt.s32.totalorder %v2178, 4
    %v2201 = vsel %vm2197, %v2181, %v2184
    %v2202 = vsel %vm2200, %v2190, 2102212464
    %v2203 = vsel %vm2199, %v2187, %v2202
    %v2204 = vsel %vm2198, %v2201, %v2203
    %v2205 = vsel %vm2197, %v2184, %v2187
    %v2206 = vsel %vm2200, %v2193, 920167782
    %v2207 = vsel %vm2199, %v2190, %v2206
    %v2208 = vsel %vm2198, %v2205, %v2207
    %v2209 = vsel %vm2197, %v2187, %v2190
    %v2210 = vsel %vm2200, %v2196, 1326507024
    %v2211 = vsel %vm2199, %v2193, %v2210
    %v2212 = vsel %vm2198, %v2209, %v2211
    %v2213 = vshll.u32 %v2173, 8
    %v2214 = vand.u32 %v2213, 65535
    %v2215 = vshrl.u32 %v2213, 16
    %v2216 = vand.u32 %v2212, 65535
    %v2217 = vshrl.u32 %v2212, 16
    %v2218 = vmul.u32 %v2214, %v2216
    %v2219 = vmul.u32 %v2214, %v2217
    %v2220 = vmul.u32 %v2215, %v2216
    %v2221 = vmul.u32 %v2215, %v2217
    %v2222 = vshll.u32 %v2219, 16
    %v2223 = vshrl.u32 %v2219, 16
    %v2224 = vshll.u32 %v2220, 16
    %v2225 = vshrl.u32 %v2220, 16
    %vm2226 = vc.u32 %v2218, %v2222
    %v2227 = vsel %vm2226, 1, 0
    %v2228 = vadd.s32 %v2218, %v2222
    %v2229 = vadd.s32 %v2221, %v2227
    %vm2230 = vc.u32 %v2228, %v2224
    %v2231 = vsel %vm2230, 1, 0
    %v2232 = vadd.s32 %v2228, %v2224
    %v2233 = vadd.s32 %v2229, %v2231
    %v2234 = vadd.s32 %v2233, %v2223
    %v2235 = vadd.s32 %v2234, %v2225
    %v2236 = vand.u32 %v2213, 65535
    %v2237 = vshrl.u32 %v2213, 16
    %v2238 = vand.u32 %v2208, 65535
    %v2239 = vshrl.u32 %v2208, 16
    %v2240 = vmul.u32 %v2236, %v2238
    %v2241 = vmul.u32 %v2236, %v2239
    %v2242 = vmul.u32 %v2237, %v2238
    %v2243 = vmul.u32 %v2237, %v2239
    %v2244 = vshll.u32 %v2241, 16
    %v2245 = vshrl.u32 %v2241, 16
    %v2246 = vshll.u32 %v2242, 16
    %v2247 = vshrl.u32 %v2242, 16
    %vm2248 = vc.u32 %v2240, %v2244
    %v2249 = vsel %vm2248, 1, 0
    %v2250 = vadd.s32 %v2240, %v2244
    %v2251 = vadd.s32 %v2243, %v2249
    %vm2252 = vc.u32 %v2250, %v2246
    %v2253 = vsel %vm2252, 1, 0
    %v2254 = vadd.s32 %v2250, %v2246
    %v2255 = vadd.s32 %v2251, %v2253
    %v2256 = vadd.s32 %v2255, %v2245
    %v2257 = vadd.s32 %v2256, %v2247
    %v2258 = vmul.u32 %v2213, %v2204
    %v2259 = vadd.s32 %v2235, %v2254
    %vm2260 = vc.u32 %v2235, %v2254
    %v2261 = vadd.s32 %v2257, 1
    %v2262 = vsel %vm2260, %v2261, %v2257
    %v2263 = vadd.s32 %v2258, %v2262
    %v2264 = vadd.s32 %v2263, 536870912
    %v2265 = vshrl.u32 %v2264, 30
    %v2266 = vshll.u32 %v2265, 30
    %v2267 = vsub.s32 %v2263, %v2266
    %vm2268 = vcmp.lt.s32.totalorder %v2267, 0
    %v2269 = vsub.s32 0, %v2267
    %v2270 = vsel %vm2268, %v2269, %v2267
    %v2271 = vclz %v2270
    %v2272 = vsub.s32 %v2271, 2
    %vm2273 = vcmp.gt.s32.totalorder 0, %v2272
    %v2274 = vsel %vm2273, 0, %v2272
    %v2275 = vsub.s32 32, %v2274
    %v2276 = vshll.u32 %v2267, %v2274
    %v2277 = vshrl.u32 %v2259, %v2275
    %v2278 = vor.u32 %v2276, %v2277
    %v2279 = vsub.s32 4294967266, %v2274
    %v2280 = vadd.s32 %v2279, 127
    %v2281 = vshll.u32 %v2280, 23
    %v2282 = vor.u32 4788187, %v2281
    %v2283 = vand.u32 2147483647, %v2282
    %v2285 = vcvt.s32.f32 %v2278
    %v2286 = vmul.f32 %v2285, %v2283
    %v2287 = vxor.u32 %v2286, 2147483648
    %v2288 = vsel %vm2167, %v2287, %v2286
    %v2289 = vsub.s32 4, %v2265
    %v2290 = vsel %vm2167, %v2289, %v2265
    %v2291 = vsel %vm2166, %v30, %v2288
    %v2292 = vsel %vm2166, 0, %v2290
    %v2293 = vmul.f32 %v2291, %v2291
    %v2294 = vmul.f32 %v2293, -0.001358992
    %v2295 = vadd.f32 %v2294, 0.041655596
    %v2296 = vmul.f32 %v2293, %v2295
    %v2297 = vadd.f32 %v2296, -0.4999988
    %v2298 = vmul.f32 %v2293, %v2297
    %v2299 = vadd.f32 1.0, %v2298
    %v2300 = vmul.f32 %v2291, %v2291
    %v2301 = vmul.f32 %v2300, -0.00019511016
    %v2302 = vadd.f32 %v2301, 0.008332121
    %v2303 = vmul.f32 %v2300, %v2302
    %v2304 = vadd.f32 %v2303, -0.16666654
    %v2305 = vmul.f32 %v2300, %v2304
    %v2306 = vadd.f32 %v2305, 1.0
    %v2307 = vmul.f32 %v2306, %v2291
    %vm2308 = vweird.f32 %v30
    %v2309 = vand.u32 %v2292, 3
    %vm2310 = vcmp.lt.s32.totalorder %v2309, 2
    %vm2311 = vcmp.eq.s32.totalorder %v2309, 0
    %v2312 = vxor.u32 %v2307, 2147483648
    %v2313 = vsel %vm2311, %v2299, %v2312
    %vm2314 = vcmp.eq.s32.totalorder %v2309, 2
    %v2315 = vxor.u32 %v2299, 2147483648
    %v2316 = vsel %vm2314, %v2315, %v2307
    %v2317 = vsel %vm2310, %v2313, %v2316
    %v2318 = vsel %vm2308, nan, %v2317
    %v2319 = vand.u32 2147483647, %v31
    %vm2320 = vcmp.le.f32.partialorder %v2319, 0.7853982
    %vm2321 = vcmp.lt.s32.totalorder %v31, 0
    %v2322 = vand.u32 %v31, 2139095040
    %v2323 = vshrl.u32 %v2322, 23
    %v2324 = vsub.s32 %v2323, 127
    %v2325 = vand.u32 2147483647, %v31
    %v2326 = vand.u32 %v2325, 8388607
    %v2327 = vor.u32 %v2326, 8388608
    %v2328 = vsub.s32 0, %v2327
    %v2329 = vadd.s32 %v2324, 1
    %vm2330 = vcmp.gt.s32.totalorder %v2329, 0
    %v2331 = vsel %vm2330, %v2329, 0
    %v2332 = vshrl.u32 %v2331, 5
    %v2333 = vand.u32 %v2331, 31
    %v2334 = vsub.s32 32, %v2333
    %v2335 = vshrl.u32 683565275, %v2334
    %v2336 = vshll.u32 683565275, %v2333
    %v2337 = vshrl.u32 2475754826, %v2334
    %v2338 = vor.u32 %v2336, %v2337
    %v2339 = vshll.u32 2475754826, %v2333
    %v2340 = vshrl.u32 2131351028, %v2334
    %v2341 = vor.u32 %v2339, %v2340
    %v2342 = vshll.u32 2131351028, %v2333
    %v2343 = vshrl.u32 2102212464, %v2334
    %v2344 = vor.u32 %v2342, %v2343
    %v2345 = vshll.u32 2102212464, %v2333
    %v2346 = vshrl.u32 920167782, %v2334
    %v2347 = vor.u32 %v2345, %v2346
    %v2348 = vshll.u32 920167782, %v2333
    %v2349 = vshrl.u32 1326507024, %v2334
    %v2350 = vor.u32 %v2348, %v2349
    %vm2351 = vcmp.lt.s32.totalorder %v2332, 1
    %vm2352 = vcmp.lt.s32.totalorder %v2332, 2
    %vm2353 = vcmp.lt.s32.totalorder %v2332, 3
    %vm2354 = vcmp.lt.s32.totalorder %v2332, 4
    %v2355 = vsel %vm2351, %v2335, %v2338
    %v2356 = vsel %vm2354, %v2344, 2102212464
    %v2357 = vsel %vm2353, %v2341, %v2356
    %v2358 = vsel %vm2352, %v2355, %v2357
    %v2359 = vsel %vm2351, %v2338, %v2341
    %v2360 = vsel %vm2354, %v2347, 920167782
    %v2361 = vsel %vm2353, %v2344, %v2360
    %v2362 = vsel %vm2352, %v2359, %v2361
    %v2363 = vsel %vm2351, %v2341, %v2344
    %v2364 = vsel %vm2354, %v2350, 1326507024
    %v2365 = vsel %vm2353, %v2347, %v2364
    %v2366 = vsel %vm2352, %v2363, %v2365
    %v2367 = vshll.u32 %v2327, 8
    %v2368 = vand.u32 %v2367, 65535
    %v2369 = vshrl.u32 %v2367, 16
    %v2370 = vand.u32 %v2366, 65535
    %v2371 = vshrl.u32 %v2366, 16
    %v2372 = vmul.u32 %v2368, %v2370
    %v2373 = vmul.u32 %v2368, %v2371
    %v2374 = vmul.u32 %v2369, %v2370
    %v2375 = vmul.u32 %v2369, %v2371
    %v2376 = vshll.u32 %v2373, 16
    %v2377 = vshrl.u32 %v2373, 16
    %v2378 = vshll.u32 %v2374, 16
    %v2379 = vshrl.u32 %v2374, 16
    %vm2380 = vc.u32 %v2372, %v2376
    %v2381 = vsel %vm2380, 1, 0
    %v2382 = vadd.s32 %v2372, %v2376
    %v2383 = vadd.s32 %v2375, %v2381
    %vm2384 = vc.u32 %v2382, %v2378
    %v2385 = vsel %vm2384, 1, 0
    %v2386 = vadd.s32 %v2382, %v2378
    %v2387 = vadd.s32 %v2383, %v2385
    %v2388 = vadd.s32 %v2387, %v2377
    %v2389 = vadd.s32 %v2388, %v2379
    %v2390 = vand.u32 %v2367, 65535
    %v2391 = vshrl.u32 %v2367, 16
    %v2392 = vand.u32 %v2362, 65535
    %v2393 = vshrl.u32 %v2362, 16
    %v2394 = vmul.u32 %v2390, %v2392
    %v2395 = vmul.u32 %v2390, %v2393
    %v2396 = vmul.u32 %v2391, %v2392
    %v2397 = vmul.u32 %v2391, %v2393
    %v2398 = vshll.u32 %v2395, 16
    %v2399 = vshrl.u32 %v2395, 16
    %v2400 = vshll.u32 %v2396, 16
    %v2401 = vshrl.u32 %v2396, 16
    %vm2402 = vc.u32 %v2394, %v2398
    %v2403 = vsel %vm2402, 1, 0
    %v2404 = vadd.s32 %v2394, %v2398
    %v2405 = vadd.s32 %v2397, %v2403
    %vm2406 = vc.u32 %v2404, %v2400
    %v2407 = vsel %vm2406, 1, 0
    %v2408 = vadd.s32 %v2404, %v2400
    %v2409 = vadd.s32 %v2405, %v2407
    %v2410 = vadd.s32 %v2409, %v2399
    %v2411 = vadd.s32 %v2410, %v2401
    %v2412 = vmul.u32 %v2367, %v2358
    %v2413 = vadd.s32 %v2389, %v2408
    %vm2414 = vc.u32 %v2389, %v2408
    %v2415 = vadd.s32 %v2411, 1
    %v2416 = vsel %vm2414, %v2415, %v2411
    %v2417 = vadd.s32 %v2412, %v2416
    %v2418 = vadd.s32 %v2417, 536870912
    %v2419 = vshrl.u32 %v2418, 30
    %v2420 = vshll.u32 %v2419, 30
    %v2421 = vsub.s32 %v2417, %v2420
    %vm2422 = vcmp.lt.s32.totalorder %v2421, 0
    %v2423 = vsub.s32 0, %v2421
    %v2424 = vsel %vm2422, %v2423, %v2421
    %v2425 = vclz %v2424
    %v2426 = vsub.s32 %v2425, 2
    %vm2427 = vcmp.gt.s32.totalorder 0, %v2426
    %v2428 = vsel %vm2427, 0, %v2426
    %v2429 = vsub.s32 32, %v2428
    %v2430 = vshll.u32 %v2421, %v2428
    %v2431 = vshrl.u32 %v2413, %v2429
    %v2432 = vor.u32 %v2430, %v2431
    %v2433 = vsub.s32 4294967266, %v2428
    %v2434 = vadd.s32 %v2433, 127
    %v2435 = vshll.u32 %v2434, 23
    %v2436 = vor.u32 4788187, %v2435
    %v2437 = vand.u32 2147483647, %v2436
    %v2439 = vcvt.s32.f32 %v2432
    %v2440 = vmul.f32 %v2439, %v2437
    %v2441 = vxor.u32 %v2440, 2147483648
    %v2442 = vsel %vm2321, %v2441, %v2440
    %v2443 = vsub.s32 4, %v2419
    %v2444 = vsel %vm2321, %v2443, %v2419
    %v2445 = vsel %vm2320, %v31, %v2442
    %v2446 = vsel %vm2320, 0, %v2444
    %v2447 = vmul.f32 %v2445, %v2445
    %v2448 = vmul.f32 %v2447, -0.001358992
    %v2449 = vadd.f32 %v2448, 0.041655596
    %v2450 = vmul.f32 %v2447, %v2449
    %v2451 = vadd.f32 %v2450, -0.4999988
    %v2452 = vmul.f32 %v2447, %v2451
    %v2453 = vadd.f32 1.0, %v2452
    %v2454 = vmul.f32 %v2445, %v2445
    %v2455 = vmul.f32 %v2454, -0.00019511016
    %v2456 = vadd.f32 %v2455, 0.008332121
    %v2457 = vmul.f32 %v2454, %v2456
    %v2458 = vadd.f32 %v2457, -0.16666654
    %v2459 = vmul.f32 %v2454, %v2458
    %v2460 = vadd.f32 %v2459, 1.0
    %v2461 = vmul.f32 %v2460, %v2445
    %vm2462 = vweird.f32 %v31
    %v2463 = vand.u32 %v2446, 3
    %vm2464 = vcmp.lt.s32.totalorder %v2463, 2
    %vm2465 = vcmp.eq.s32.totalorder %v2463, 0
    %v2466 = vxor.u32 %v2461, 2147483648
    %v2467 = vsel %vm2465, %v2453, %v2466
    %vm2468 = vcmp.eq.s32.totalorder %v2463, 2
    %v2469 = vxor.u32 %v2453, 2147483648
    %v2470 = vsel %vm2468, %v2469, %v2461
    %v2471 = vsel %vm2464, %v2467, %v2470
    %v2472 = vsel %vm2462, nan, %v2471
    %v2473 = vand.u32 2147483647, %v32
    %vm2474 = vcmp.le.f32.partialorder %v2473, 0.7853982
    %vm2475 = vcmp.lt.s32.totalorder %v32, 0
    %v2476 = vand.u32 %v32, 2139095040
    %v2477 = vshrl.u32 %v2476, 23
    %v2478 = vsub.s32 %v2477, 127
    %v2479 = vand.u32 2147483647, %v32
    %v2480 = vand.u32 %v2479, 8388607
    %v2481 = vor.u32 %v2480, 8388608
    %v2482 = vsub.s32 0, %v2481
    %v2483 = vadd.s32 %v2478, 1
    %vm2484 = vcmp.gt.s32.totalorder %v2483, 0
    %v2485 = vsel %vm2484, %v2483, 0
    %v2486 = vshrl.u32 %v2485, 5
    %v2487 = vand.u32 %v2485, 31
    %v2488 = vsub.s32 32, %v2487
    %v2489 = vshrl.u32 683565275, %v2488
    %v2490 = vshll.u32 683565275, %v2487
    %v2491 = vshrl.u32 2475754826, %v2488
    %v2492 = vor.u32 %v2490, %v2491
    %v2493 = vshll.u32 2475754826, %v2487
    %v2494 = vshrl.u32 2131351028, %v2488
    %v2495 = vor.u32 %v2493, %v2494
    %v2496 = vshll.u32 2131351028, %v2487
    %v2497 = vshrl.u32 2102212464, %v2488
    %v2498 = vor.u32 %v2496, %v2497
    %v2499 = vshll.u32 2102212464, %v2487
    %v2500 = vshrl.u32 920167782, %v2488
    %v2501 = vor.u32 %v2499, %v2500
    %v2502 = vshll.u32 920167782, %v2487
    %v2503 = vshrl.u32 1326507024, %v2488
    %v2504 = vor.u32 %v2502, %v2503
    %vm2505 = vcmp.lt.s32.totalorder %v2486, 1
    %vm2506 = vcmp.lt.s32.totalorder %v2486, 2
    %vm2507 = vcmp.lt.s32.totalorder %v2486, 3
    %vm2508 = vcmp.lt.s32.totalorder %v2486, 4
    %v2509 = vsel %vm2505, %v2489, %v2492
    %v2510 = vsel %vm2508, %v2498, 2102212464
    %v2511 = vsel %vm2507, %v2495, %v2510
    %v2512 = vsel %vm2506, %v2509, %v2511
    %v2513 = vsel %vm2505, %v2492, %v2495
    %v2514 = vsel %vm2508, %v2501, 920167782
    %v2515 = vsel %vm2507, %v2498, %v2514
    %v2516 = vsel %vm2506, %v2513, %v2515
    %v2517 = vsel %vm2505, %v2495, %v2498
    %v2518 = vsel %vm2508, %v2504, 1326507024
    %v2519 = vsel %vm2507, %v2501, %v2518
    %v2520 = vsel %vm2506, %v2517, %v2519
    %v2521 = vshll.u32 %v2481, 8
    %v2522 = vand.u32 %v2521, 65535
    %v2523 = vshrl.u32 %v2521, 16
    %v2524 = vand.u32 %v2520, 65535
    %v2525 = vshrl.u32 %v2520, 16
    %v2526 = vmul.u32 %v2522, %v2524
    %v2527 = vmul.u32 %v2522, %v2525
    %v2528 = vmul.u32 %v2523, %v2524
    %v2529 = vmul.u32 %v2523, %v2525
    %v2530 = vshll.u32 %v2527, 16
    %v2531 = vshrl.u32 %v2527, 16
    %v2532 = vshll.u32 %v2528, 16
    %v2533 = vshrl.u32 %v2528, 16
    %vm2534 = vc.u32 %v2526, %v2530
    %v2535 = vsel %vm2534, 1, 0
    %v2536 = vadd.s32 %v2526, %v2530
    %v2537 = vadd.s32 %v2529, %v2535
    %vm2538 = vc.u32 %v2536, %v2532
    %v2539 = vsel %vm2538, 1, 0
    %v2540 = vadd.s32 %v2536, %v2532
    %v2541 = vadd.s32 %v2537, %v2539
    %v2542 = vadd.s32 %v2541, %v2531
    %v2543 = vadd.s32 %v2542, %v2533
    %v2544 = vand.u32 %v2521, 65535
    %v2545 = vshrl.u32 %v2521, 16
    %v2546 = vand.u32 %v2516, 65535
    %v2547 = vshrl.u32 %v2516, 16
    %v2548 = vmul.u32 %v2544, %v2546
    %v2549 = vmul.u32 %v2544, %v2547
    %v2550 = vmul.u32 %v2545, %v2546
    %v2551 = vmul.u32 %v2545, %v2547
    %v2552 = vshll.u32 %v2549, 16
    %v2553 = vshrl.u32 %v2549, 16
    %v2554 = vshll.u32 %v2550, 16
    %v2555 = vshrl.u32 %v2550, 16
    %vm2556 = vc.u32 %v2548, %v2552
    %v2557 = vsel %vm2556, 1, 0
    %v2558 = vadd.s32 %v2548, %v2552
    %v2559 = vadd.s32 %v2551, %v2557
    %vm2560 = vc.u32 %v2558, %v2554
    %v2561 = vsel %vm2560, 1, 0
    %v2562 = vadd.s32 %v2558, %v2554
    %v2563 = vadd.s32 %v2559, %v2561
    %v2564 = vadd.s32 %v2563, %v2553
    %v2565 = vadd.s32 %v2564, %v2555
    %v2566 = vmul.u32 %v2521, %v2512
    %v2567 = vadd.s32 %v2543, %v2562
    %vm2568 = vc.u32 %v2543, %v2562
    %v2569 = vadd.s32 %v2565, 1
    %v2570 = vsel %vm2568, %v2569, %v2565
    %v2571 = vadd.s32 %v2566, %v2570
    %v2572 = vadd.s32 %v2571, 536870912
    %v2573 = vshrl.u32 %v2572, 30
    %v2574 = vshll.u32 %v2573, 30
    %v2575 = vsub.s32 %v2571, %v2574
    %vm2576 = vcmp.lt.s32.totalorder %v2575, 0
    %v2577 = vsub.s32 0, %v2575
    %v2578 = vsel %vm2576, %v2577, %v2575
    %v2579 = vclz %v2578
    %v2580 = vsub.s32 %v2579, 2
    %vm2581 = vcmp.gt.s32.totalorder 0, %v2580
    %v2582 = vsel %vm2581, 0, %v2580
    %v2583 = vsub.s32 32, %v2582
    %v2584 = vshll.u32 %v2575, %v2582
    %v2585 = vshrl.u32 %v2567, %v2583
    %v2586 = vor.u32 %v2584, %v2585
    %v2587 = vsub.s32 4294967266, %v2582
    %v2588 = vadd.s32 %v2587, 127
    %v2589 = vshll.u32 %v2588, 23
    %v2590 = vor.u32 4788187, %v2589
    %v2591 = vand.u32 2147483647, %v2590
    %v2593 = vcvt.s32.f32 %v2586
    %v2594 = vmul.f32 %v2593, %v2591
    %v2595 = vxor.u32 %v2594, 2147483648
    %v2596 = vsel %vm2475, %v2595, %v2594
    %v2597 = vsub.s32 4, %v2573
    %v2598 = vsel %vm2475, %v2597, %v2573
    %v2599 = vsel %vm2474, %v32, %v2596
    %v2600 = vsel %vm2474, 0, %v2598
    %v2601 = vmul.f32 %v2599, %v2599
    %v2602 = vmul.f32 %v2601, -0.001358992
    %v2603 = vadd.f32 %v2602, 0.041655596
    %v2604 = vmul.f32 %v2601, %v2603
    %v2605 = vadd.f32 %v2604, -0.4999988
    %v2606 = vmul.f32 %v2601, %v2605
    %v2607 = vadd.f32 1.0, %v2606
    %v2608 = vmul.f32 %v2599, %v2599
    %v2609 = vmul.f32 %v2608, -0.00019511016
    %v2610 = vadd.f32 %v2609, 0.008332121
    %v2611 = vmul.f32 %v2608, %v2610
    %v2612 = vadd.f32 %v2611, -0.16666654
    %v2613 = vmul.f32 %v2608, %v2612
    %v2614 = vadd.f32 %v2613, 1.0
    %v2615 = vmul.f32 %v2614, %v2599
    %vm2616 = vweird.f32 %v32
    %v2617 = vand.u32 %v2600, 3
    %vm2618 = vcmp.lt.s32.totalorder %v2617, 2
    %vm2619 = vcmp.eq.s32.totalorder %v2617, 0
    %v2620 = vxor.u32 %v2615, 2147483648
    %v2621 = vsel %vm2619, %v2607, %v2620
    %vm2622 = vcmp.eq.s32.totalorder %v2617, 2
    %v2623 = vxor.u32 %v2607, 2147483648
    %v2624 = vsel %vm2622, %v2623, %v2615
    %v2625 = vsel %vm2618, %v2621, %v2624
    %v2626 = vsel %vm2616, nan, %v2625
    %2627 = vrot.lane.b32.xlu0 %v1548, 127
    %v2628 = vpop.permute.xlu0 %2627
    %2629 = vrot.lane.b32.xlu0 %v1702, 127
    %v2630 = vpop.permute.xlu0 %2629
    %2631 = vrot.lane.b32.xlu0 %v1856, 127
    %v2632 = vpop.permute.xlu0 %2631
    %2633 = vrot.lane.b32.xlu0 %v2010, 127
    %v2634 = vpop.permute.xlu0 %2633
    %2635 = vrot.lane.b32.xlu0 %v2164, 127
    %v2636 = vpop.permute.xlu0 %2635
    %2637 = vrot.lane.b32.xlu0 %v2318, 127
    %v2638 = vpop.permute.xlu0 %2637
    %2639 = vrot.lane.b32.xlu0 %v2472, 127
    %v2640 = vpop.permute.xlu0 %2639
    %2641 = vrot.lane.b32.xlu0 %v2626, 127
    %v2642 = vpop.permute.xlu0 %2641
    %vm2643 = vcmp.eq.s32.totalorder %v46, 7
    %v2644 = vsel %vm2643, 1.0, %v2628
    %v2645 = vsel %vm2643, 1.0, %v2630
    %v2646 = vsel %vm2643, 1.0, %v2632
    %v2647 = vsel %vm2643, 1.0, %v2634
    %v2648 = vsel %vm2643, 1.0, %v2636
    %v2649 = vsel %vm2643, 1.0, %v2638
    %v2650 = vsel %vm2643, 1.0, %v2640
    %v2651 = vsel %vm2643, 1.0, %v2642
    %v2652 = vmul.f32 %v1387, %v2644
    %v2653 = vmul.f32 %v1388, %v2645
    %v2654 = vmul.f32 %v1389, %v2646
    %v2655 = vmul.f32 %v1390, %v2647
    %v2656 = vmul.f32 %v1391, %v2648
    %v2657 = vmul.f32 %v1392, %v2649
    %v2658 = vmul.f32 %v1393, %v2650
    %v2659 = vmul.f32 %v1394, %v2651
    %2660 = vst [vmem:[#allocation5] sm:$0xff] %v2652
    %2661 = vst [vmem:[#allocation5 + $0x8] sm:$0xff] %v2653
    %2662 = vst [vmem:[#allocation5 + $0x10] sm:$0xff] %v2654
    %2663 = vst [vmem:[#allocation5 + $0x18] sm:$0xff] %v2655
    %2664 = vst [vmem:[#allocation5 + $0x20] sm:$0xff] %v2656
    %2665 = vst [vmem:[#allocation5 + $0x28] sm:$0xff] %v2657
    %2666 = vst [vmem:[#allocation5 + $0x30] sm:$0xff] %v2658
    %2667 = vst [vmem:[#allocation5 + $0x38] sm:$0xff] %v2659
    // Predicated region
    $region10: #{tpu_custom_call.1} parent=1 // pred_check
      _
    $region11: #{tpu_custom_call.1} parent=1 // pred_check_branch
      %2669 = sbr.rel (0) target = $region13
    $region12: #{tpu_custom_call.1} parent=1 // pred_region
      %2671 = vsyncadd [#allocation4], 0
      %s2672 = sshll.u32 [#allocation5], 4
      %s2673 = int_to_ptr.vmem [resolvable:$true] %s2672
      %s2674 = sshll.u32 %s1, 4
      %s2675 = int_to_ptr.hbm [resolvable:$true] %s2674
      %2680 = dma.vmem_to_hbm [thread:$0]  %s2673, 1024, %s2675, [#allocation4], 128, 128, 8
    $region13: #{tpu_custom_call.1} parent=1 // pred_fallthru
      _
    // Predicated region
    $region14: #{tpu_custom_call.1} parent=1 // pred_check
      _
    $region15: #{tpu_custom_call.1} parent=1 // pred_check_branch
      %2682 = sbr.rel (0) target = $region17
    $region16: #{tpu_custom_call.1} parent=1 // pred_region
      %2684 = dma.done [#allocation4], 1024
    $region17: #{tpu_custom_call.1} parent=1 // pred_fallthru
      _
    %2685 = vsyncpa [#allocation3], 1
    %2686 = vsyncpa [#allocation4], 1

</llo_original>
